<compile_context>
chip_gen: v6e
topology: v6e:2x2x1
jax: 0.10.0
libtpu: 0.0.40
codegen_flags: <defaults>
</compile_context>

<pallas_src>
import functools

import jax
import jax.numpy as jnp
from jax import lax
from jax.experimental import pallas as pl
from jax.experimental.pallas import tpu as pltpu


SELECTED_LAYERS = (3, 6, 9, 12)
N_SRC_LAYERS = 13
OUT_PAD = 128          # lane-dense padded output width
MAX_BATCH_TILE = 512   # rows per grid step (weights + 2x buffered tiles << 32 MiB)
_EPS = 1e-5


def _round_up(x, m):
    return ((x + m - 1) // m) * m


# ----------------------------------------------------------------------------
# Pallas kernel: whole forward pass for one batch tile, weights resident.
# ----------------------------------------------------------------------------
def _mood_kernel(x_ref,          # [TB, S]      f32  flattened raw source rows (S = 13*D)
                 w_in_ref,       # [S, D]       bf16 selection-folded input_proj weight
                 w_att_ref,      # [L, D, D]    bf16 fused W_v @ W_o + I (residual folded)
                 w1_ref,         # [L, D, 4D]   bf16 ffn linear1 weight
                 w2_ref,         # [L, 4D, D]   bf16 ffn linear2 weight
                 w_out_ref,      # [D, 128]     bf16 output_proj (final-LN affine folded, padded)
                 vecs_ref,       # [1+6L, D]    f32  packed: b_in | per-layer (b_att,g1,be1,b2,g2,be2)
                 b1_ref,         # [L, 4D]      f32  ffn linear1 bias
                 b_out_ref,      # [1, 128]     f32  output_proj bias (folded, padded)
                 out_ref):       # [TB, 128]    f32

    def ln(h, g, b):
        mu = jnp.mean(h, axis=-1, keepdims=True)
        c = h - mu
        var = jnp.mean(c * c, axis=-1, keepdims=True)
        return c * lax.rsqrt(var + _EPS) * g + b

    def mxu(a_f32, w_bf16):
        # bf16 operands on the MXU, f32 accumulation; elementwise math stays f32.
        return jnp.dot(a_f32.astype(jnp.bfloat16), w_bf16,
                       preferred_element_type=jnp.float32)

    # ---- input projection (layer selection folded into W_in) ----
    b_in = vecs_ref[0:1, :]
    x = mxu(x_ref[...], w_in_ref[...]) + b_in                       # [TB, D]

    num_layers = w_att_ref.shape[0]
    for l in range(num_layers):
        base = 1 + 6 * l
        b_att = vecs_ref[base + 0:base + 1, :]
        g1    = vecs_ref[base + 1:base + 2, :]
        be1   = vecs_ref[base + 2:base + 3, :]
        b2    = vecs_ref[base + 3:base + 4, :]
        g2    = vecs_ref[base + 4:base + 5, :]
        be2   = vecs_ref[base + 5:base + 6, :]

        # --- self-attention (seq_len==1): one matmul, residual folded into +I ---
        x = ln(mxu(x, w_att_ref[l]) + b_att, g1, be1)

        # --- feed-forward: linear2(relu(linear1(x))) + residual ---
        h = jnp.maximum(mxu(x, w1_ref[l]) + b1_ref[l:l + 1, :], 0.0)
        x = ln(x + mxu(h, w2_ref[l]) + b2, g2, be2)

    # ---- final layer norm (affine folded into output projection) ----
    mu = jnp.mean(x, axis=-1, keepdims=True)
    c = x - mu
    var = jnp.mean(c * c, axis=-1, keepdims=True)
    xn = c * lax.rsqrt(var + _EPS)

    # ---- lane-dense (128-wide) output projection ----
    out_ref[...] = mxu(xn, w_out_ref[...]) + b_out_ref[...]


# ----------------------------------------------------------------------------
# Wrapper: batch-tiled pallas_call; weights resident across the grid.
# ----------------------------------------------------------------------------
@functools.partial(jax.jit, static_argnames=("output_size",))
def music_mood_forward(source, kparams, *, output_size):
    """source: [B, n_src_layers, d_model] (same layout as the torch `source`)."""
    B, n_src, D = source.shape
    S = n_src * D
    x2d = source.reshape(B, S).astype(jnp.float32)     # free reshape (contiguous)

    TB = min(MAX_BATCH_TILE, _round_up(B, 8))
    B_pad = _round_up(B, TB)
    if B_pad != B:
        x2d = jnp.pad(x2d, ((0, B_pad - B), (0, 0)))
    grid = (B_pad // TB,)

    L = kparams["w_att"].shape[0]
    Dff = kparams["w1"].shape[-1]

    def const_spec(shape):
        nd = len(shape)
        return pl.BlockSpec(shape, lambda i, _nd=nd: (0,) * _nd)   # resident weights

    in_specs = [
        pl.BlockSpec((TB, S), lambda i: (i, 0)),        # source tile (pipelined)
        const_spec(kparams["w_in"].shape),
        const_spec(kparams["w_att"].shape),
        const_spec(kparams["w1"].shape),
        const_spec(kparams["w2"].shape),
        const_spec(kparams["w_out"].shape),
        const_spec(kparams["vecs"].shape),
        const_spec(kparams["b1"].shape),
        const_spec(kparams["b_out"].shape),
    ]
    out_specs = pl.BlockSpec((TB, OUT_PAD), lambda i: (i, 0))

    flops = 2 * B_pad * (S * D + L * (D * D + 2 * D * Dff) + D * OUT_PAD)
    bytes_accessed = int(
        x2d.size * 4 + B_pad * OUT_PAD * 4
        + sum(int(v.size) * v.dtype.itemsize for v in kparams.values()))
    cost = pl.CostEstimate(flops=int(flops),
                           transcendentals=int(B_pad * (2 * L + 1)),
                           bytes_accessed=bytes_accessed)

    out = pl.pallas_call(
        _mood_kernel,
        out_shape=jax.ShapeDtypeStruct((B_pad, OUT_PAD), jnp.float32),
        grid=grid,
        in_specs=in_specs,
        out_specs=out_specs,
        compiler_params=pltpu.CompilerParams(
            dimension_semantics=("parallel",),
            vmem_limit_bytes=32 * 1024 * 1024),
        cost_estimate=cost,
    )(x2d, kparams["w_in"], kparams["w_att"], kparams["w1"], kparams["w2"],
      kparams["w_out"], kparams["vecs"], kparams["b1"], kparams["b_out"])

    return out[:B, :output_size]


# ----------------------------------------------------------------------------
# One-time algebraic fusion + packing (NOT inside the jitted forward).
# ----------------------------------------------------------------------------
def prepare_kernel_params(params, n_src_layers=N_SRC_LAYERS):
    w_v, b_v = params["w_v"], params["b_v"]          # [L,D,D], [L,1,D]
    w_o, b_o = params["w_o"], params["b_o"]          # [L,D,D], [L,1,D]
    L, D, _ = w_v.shape
    O = params["w_out"].shape[-1]
    assert O <= OUT_PAD, "output_size must be <= 128 for the lane-padded output"

    # fold layer selection into input projection: zero-padded [n_src*D, D]
    w_in_full = jnp.zeros((n_src_layers * D, D), jnp.float32)
    for j, layer in enumerate(SELECTED_LAYERS):
        w_in_full = w_in_full.at[layer * D:(layer + 1) * D, :].set(
            params["w_in"][j * D:(j + 1) * D, :])

    # fuse attention V-proj and out-proj; fold the residual add into +I
    w_att = jnp.einsum("lij,ljk->lik", w_v, w_o) + jnp.eye(D, dtype=jnp.float32)[None]
    b_att = jnp.einsum("lij,ljk->lik", b_v, w_o) + b_o

    # fold final layer-norm affine into output projection; pad to 128 lanes
    w_out_f = params["g_f"].reshape(D, 1) * params["w_out"]               # [D, O]
    b_out_f = params["b_f"] @ params["w_out"] + params["b_out"]           # [1, O]
    w_out_pad = jnp.zeros((D, OUT_PAD), jnp.float32).at[:, :O].set(w_out_f)
    b_out_pad = jnp.zeros((1, OUT_PAD), jnp.float32).at[:, :O].set(b_out_f)

    # pack all D-length vectors into one slab:
    #   row 0           : b_in
    #   rows 1+6l..6+6l : b_att, g1, be1, b2, g2, be2 for layer l
    rows = [params["b_in"].reshape(1, D)]
    for l in range(L):
        rows += [
            b_att[l].reshape(1, D),
            params["g1"][l].reshape(1, D), params["be1"][l].reshape(1, D),
            params["b2"][l].reshape(1, D),
            params["g2"][l].reshape(1, D), params["be2"][l].reshape(1, D),
        ]
    vecs = jnp.concatenate(rows, axis=0)                                  # [1+6L, D]

    return {
        # bf16 weight slabs (MXU operands / dominant DMA bytes)
        "w_in": w_in_full.astype(jnp.bfloat16),                  # [13D, D]
        "w_att": w_att.astype(jnp.bfloat16),                     # [L, D, D]
        "w1": params["w1"].astype(jnp.bfloat16),                 # [L, D, 4D]
        "w2": params["w2"].astype(jnp.bfloat16),                 # [L, 4D, D]
        "w_out": w_out_pad.astype(jnp.bfloat16),                 # [D, 128]
        # f32 vectors (VPU adds / LN affine stay f32 — v5e-safe)
        "b_out": b_out_pad.astype(jnp.float32),                  # [1, 128]
        "vecs": vecs.astype(jnp.float32),                        # [1+6L, D]
        "b1": params["b1"].reshape(L, 4 * D).astype(jnp.float32),  # [L, 4D]
    }


# ----------------------------------------------------------------------------
# Deterministic parameter construction (shapes mirror the torch module).
# Linear weights are stored pre-transposed: [in_features, out_features].
# ----------------------------------------------------------------------------
def make_params(key, d_model, output_size, num_layers=3):
    ks = jax.random.split(key, 16)
    s = 0.05

    def rnd(k, shape):
        return jax.random.normal(k, shape, jnp.float32) * s

    return {
        "w_in": rnd(ks[0], (4 * d_model, d_model)),
        "b_in": rnd(ks[1], (1, d_model)),
        "w_v": rnd(ks[2], (num_layers, d_model, d_model)),
        "b_v": rnd(ks[3], (num_layers, 1, d_model)),
        "w_o": rnd(ks[4], (num_layers, d_model, d_model)),
        "b_o": rnd(ks[5], (num_layers, 1, d_model)),
        "g1": jnp.ones((num_layers, 1, d_model), jnp.float32),
        "be1": jnp.zeros((num_layers, 1, d_model), jnp.float32),
        "w1": rnd(ks[6], (num_layers, d_model, 4 * d_model)),
        "b1": rnd(ks[7], (num_layers, 1, 4 * d_model)),
        "w2": rnd(ks[8], (num_layers, 4 * d_model, d_model)),
        "b2": rnd(ks[9], (num_layers, 1, d_model)),
        "g2": jnp.ones((num_layers, 1, d_model), jnp.float32),
        "be2": jnp.zeros((num_layers, 1, d_model), jnp.float32),
        "g_f": jnp.ones((1, d_model), jnp.float32),
        "b_f": jnp.zeros((1, d_model), jnp.float32),
        "w_out": rnd(ks[10], (d_model, output_size)),
        "b_out": rnd(ks[11], (1, output_size)),
    }


# ----------------------------------------------------------------------------
# Pure-JAX reference (unfused, torch-equivalent math, f32) for a sanity check.
# ----------------------------------------------------------------------------
def reference_forward(source, params):
    B = source.shape[0]
    d_model = source.shape[-1]
    x = source[:, jnp.array(SELECTED_LAYERS), :].reshape(
        B, len(SELECTED_LAYERS) * d_model)

    def ln(h, g, b):
        mu = jnp.mean(h, -1, keepdims=True)
        var = jnp.mean((h - mu) ** 2, -1, keepdims=True)
        return (h - mu) / jnp.sqrt(var + 1e-5) * g + b

    x = x @ params["w_in"] + params["b_in"]
    L = params["w_v"].shape[0]
    for l in range(L):
        v = x @ params["w_v"][l] + params["b_v"][l]
        attn = v @ params["w_o"][l] + params["b_o"][l]
        x = ln(x + attn, params["g1"][l], params["be1"][l])
        h = jnp.maximum(x @ params["w1"][l] + params["b1"][l], 0.0)
        ff = h @ params["w2"][l] + params["b2"][l]
        x = ln(x + ff, params["g2"][l], params["be2"][l])
    x = ln(x, params["g_f"], params["b_f"])
    return x @ params["w_out"] + params["b_out"]


if __name__ == "__main__":
    d_model = 32
    output_size = 4
    num_layers = 3
    B = 8

    key = jax.random.PRNGKey(0)
    k_src, k_par = jax.random.split(key)
    source = jax.random.normal(k_src, (B, N_SRC_LAYERS, d_model), jnp.float32)
    params = make_params(k_par, d_model, output_size, num_layers)

    # one-time fusion / bf16 packing outside the jitted forward
    kparams = jax.tree_util.tree_map(jax.block_until_ready,
                                     prepare_kernel_params(params))

    out = music_mood_forward(source, kparams, output_size=output_size)
    out = jax.block_until_ready(out)

    ref = reference_forward(source, params)
    assert out.shape == (B, output_size)
    assert bool(jnp.all(jnp.isfinite(out)))
    # bf16 MXU operands (f32 accumulation) => looser tolerance than pure f32
    assert bool(jnp.allclose(out, ref, atol=3e-2, rtol=3e-2))

    print("KERNEL_OK")
</pallas_src>

<mosaic_0001>
module attributes {stable_mosaic.version = 11 : i64} {
  func.func @_mood_kernel(%arg0: i32, %arg1: memref<8x416xf32, #tpu.memory_space<vmem>>, %arg2: memref<416x32xbf16, #tpu.memory_space<vmem>>, %arg3: memref<3x32x32xbf16, #tpu.memory_space<vmem>>, %arg4: memref<3x32x128xbf16, #tpu.memory_space<vmem>>, %arg5: memref<3x128x32xbf16, #tpu.memory_space<vmem>>, %arg6: memref<32x128xbf16, #tpu.memory_space<vmem>>, %arg7: memref<19x32xf32, #tpu.memory_space<vmem>>, %arg8: memref<3x128xf32, #tpu.memory_space<vmem>>, %arg9: memref<1x128xf32, #tpu.memory_space<vmem>>, %arg10: memref<8x128xf32, #tpu.memory_space<vmem>>) attributes {dimension_semantics = [#tpu.dimension_semantics<parallel>], iteration_bounds = array<i64: 1>, scalar_prefetch = 0 : i64, scratch_operands = 0 : i64, tpu.core_type = #tpu.core_type<tc>, window_params = [{transform_indices = @transform_0, window_bounds = array<i64: 8, 416>}, {pipeline_mode = #tpu.pipeline_mode<synchronous>, transform_indices = @transform_1, window_bounds = array<i64: 416, 32>}, {pipeline_mode = #tpu.pipeline_mode<synchronous>, transform_indices = @transform_2, window_bounds = array<i64: 3, 32, 32>}, {pipeline_mode = #tpu.pipeline_mode<synchronous>, transform_indices = @transform_3, window_bounds = array<i64: 3, 32, 128>}, {pipeline_mode = #tpu.pipeline_mode<synchronous>, transform_indices = @transform_4, window_bounds = array<i64: 3, 128, 32>}, {pipeline_mode = #tpu.pipeline_mode<synchronous>, transform_indices = @transform_5, window_bounds = array<i64: 32, 128>}, {pipeline_mode = #tpu.pipeline_mode<synchronous>, transform_indices = @transform_6, window_bounds = array<i64: 19, 32>}, {pipeline_mode = #tpu.pipeline_mode<synchronous>, transform_indices = @transform_7, window_bounds = array<i64: 3, 128>}, {pipeline_mode = #tpu.pipeline_mode<synchronous>, transform_indices = @transform_8, window_bounds = array<i64: 1, 128>}, {transform_indices = @transform_9, window_bounds = array<i64: 8, 128>}]} {
    %c0 = arith.constant 0 : index
    %c0_0 = arith.constant 0 : index
    %0 = vector.load %arg7[%c0, %c0_0] : memref<19x32xf32, #tpu.memory_space<vmem>>, vector<1x32xf32>
    %c0_1 = arith.constant 0 : index
    %c0_2 = arith.constant 0 : index
    %1 = vector.load %arg1[%c0_1, %c0_2] : memref<8x416xf32, #tpu.memory_space<vmem>>, vector<8x416xf32>
    %c0_3 = arith.constant 0 : index
    %c0_4 = arith.constant 0 : index
    %2 = vector.load %arg2[%c0_3, %c0_4] : memref<416x32xbf16, #tpu.memory_space<vmem>>, vector<416x32xbf16>
    %3 = arith.truncf %1 : vector<8x416xf32> to vector<8x416xbf16>
    %cst = arith.constant dense<0.000000e+00> : vector<8x32xf32>
    %4 = tpu.matmul %3, %2, %cst {dimension_numbers = #tpu.dot_dimension_numbers<[1], [0], [0], [1], [0, 0, 1, 1], [], []>} : vector<8x416xbf16>, vector<416x32xbf16>, vector<8x32xf32> -> vector<8x32xf32>
    %5 = vector.broadcast %0 : vector<1x32xf32> to vector<8x32xf32>
    %6 = arith.addf %4, %5 : vector<8x32xf32>
    %c1 = arith.constant 1 : index
    %c0_5 = arith.constant 0 : index
    %7 = vector.load %arg7[%c1, %c0_5] : memref<19x32xf32, #tpu.memory_space<vmem>>, vector<1x32xf32>
    %c2 = arith.constant 2 : index
    %c0_6 = arith.constant 0 : index
    %8 = vector.load %arg7[%c2, %c0_6] : memref<19x32xf32, #tpu.memory_space<vmem>>, vector<1x32xf32>
    %c3 = arith.constant 3 : index
    %c0_7 = arith.constant 0 : index
    %9 = vector.load %arg7[%c3, %c0_7] : memref<19x32xf32, #tpu.memory_space<vmem>>, vector<1x32xf32>
    %c4 = arith.constant 4 : index
    %c0_8 = arith.constant 0 : index
    %10 = vector.load %arg7[%c4, %c0_8] : memref<19x32xf32, #tpu.memory_space<vmem>>, vector<1x32xf32>
    %c5 = arith.constant 5 : index
    %c0_9 = arith.constant 0 : index
    %11 = vector.load %arg7[%c5, %c0_9] : memref<19x32xf32, #tpu.memory_space<vmem>>, vector<1x32xf32>
    %c6 = arith.constant 6 : index
    %c0_10 = arith.constant 0 : index
    %12 = vector.load %arg7[%c6, %c0_10] : memref<19x32xf32, #tpu.memory_space<vmem>>, vector<1x32xf32>
    %c0_11 = arith.constant 0 : index
    %c0_12 = arith.constant 0 : index
    %c0_13 = arith.constant 0 : index
    %13 = vector.load %arg3[%c0_11, %c0_12, %c0_13] : memref<3x32x32xbf16, #tpu.memory_space<vmem>>, vector<1x32x32xbf16>
    %14 = vector.shape_cast %13 : vector<1x32x32xbf16> to vector<32x32xbf16>
    %15 = arith.truncf %6 : vector<8x32xf32> to vector<8x32xbf16>
    %cst_14 = arith.constant dense<0.000000e+00> : vector<8x32xf32>
    %16 = tpu.matmul %15, %14, %cst_14 {dimension_numbers = #tpu.dot_dimension_numbers<[1], [0], [0], [1], [0, 0, 1, 1], [], []>} : vector<8x32xbf16>, vector<32x32xbf16>, vector<8x32xf32> -> vector<8x32xf32>
    %17 = vector.broadcast %7 : vector<1x32xf32> to vector<8x32xf32>
    %18 = arith.addf %16, %17 : vector<8x32xf32>
    %cst_15 = arith.constant dense<0.000000e+00> : vector<8xf32>
    %19 = vector.multi_reduction <add>, %18, %cst_15 [1] : vector<8x32xf32> to vector<8xf32>
    %20 = vector.shape_cast %19 : vector<8xf32> to vector<8x1xf32>
    %cst_16 = arith.constant 3.200000e+01 : f32
    %21 = vector.broadcast %cst_16 : f32 to vector<8x1xf32>
    %22 = arith.divf %20, %21 : vector<8x1xf32>
    %23 = vector.broadcast %22 : vector<8x1xf32> to vector<8x32xf32>
    %24 = arith.subf %18, %23 : vector<8x32xf32>
    %25 = arith.mulf %24, %24 : vector<8x32xf32>
    %cst_17 = arith.constant dense<0.000000e+00> : vector<8xf32>
    %26 = vector.multi_reduction <add>, %25, %cst_17 [1] : vector<8x32xf32> to vector<8xf32>
    %27 = vector.shape_cast %26 : vector<8xf32> to vector<8x1xf32>
    %cst_18 = arith.constant 3.200000e+01 : f32
    %28 = vector.broadcast %cst_18 : f32 to vector<8x1xf32>
    %29 = arith.divf %27, %28 : vector<8x1xf32>
    %cst_19 = arith.constant 9.99999974E-6 : f32
    %30 = vector.broadcast %cst_19 : f32 to vector<8x1xf32>
    %31 = arith.addf %29, %30 : vector<8x1xf32>
    %32 = math.rsqrt %31 : vector<8x1xf32>
    %33 = vector.broadcast %32 : vector<8x1xf32> to vector<8x32xf32>
    %34 = arith.mulf %24, %33 : vector<8x32xf32>
    %35 = vector.broadcast %8 : vector<1x32xf32> to vector<8x32xf32>
    %36 = arith.mulf %34, %35 : vector<8x32xf32>
    %37 = vector.broadcast %9 : vector<1x32xf32> to vector<8x32xf32>
    %38 = arith.addf %36, %37 : vector<8x32xf32>
    %c0_20 = arith.constant 0 : index
    %c0_21 = arith.constant 0 : index
    %c0_22 = arith.constant 0 : index
    %39 = vector.load %arg4[%c0_20, %c0_21, %c0_22] : memref<3x32x128xbf16, #tpu.memory_space<vmem>>, vector<1x32x128xbf16>
    %40 = vector.shape_cast %39 : vector<1x32x128xbf16> to vector<32x128xbf16>
    %41 = arith.truncf %38 : vector<8x32xf32> to vector<8x32xbf16>
    %cst_23 = arith.constant dense<0.000000e+00> : vector<8x128xf32>
    %42 = tpu.matmul %41, %40, %cst_23 {dimension_numbers = #tpu.dot_dimension_numbers<[1], [0], [0], [1], [0, 0, 1, 1], [], []>} : vector<8x32xbf16>, vector<32x128xbf16>, vector<8x128xf32> -> vector<8x128xf32>
    %c0_24 = arith.constant 0 : index
    %c0_25 = arith.constant 0 : index
    %43 = vector.load %arg8[%c0_24, %c0_25] : memref<3x128xf32, #tpu.memory_space<vmem>>, vector<1x128xf32>
    %44 = vector.broadcast %43 : vector<1x128xf32> to vector<8x128xf32>
    %45 = arith.addf %42, %44 : vector<8x128xf32>
    %cst_26 = arith.constant 0.000000e+00 : f32
    %46 = vector.broadcast %cst_26 : f32 to vector<8x128xf32>
    %47 = arith.maximumf %45, %46 : vector<8x128xf32>
    %c0_27 = arith.constant 0 : index
    %c0_28 = arith.constant 0 : index
    %c0_29 = arith.constant 0 : index
    %48 = vector.load %arg5[%c0_27, %c0_28, %c0_29] : memref<3x128x32xbf16, #tpu.memory_space<vmem>>, vector<1x128x32xbf16>
    %49 = vector.shape_cast %48 : vector<1x128x32xbf16> to vector<128x32xbf16>
    %50 = arith.truncf %47 : vector<8x128xf32> to vector<8x128xbf16>
    %cst_30 = arith.constant dense<0.000000e+00> : vector<8x32xf32>
    %51 = tpu.matmul %50, %49, %cst_30 {dimension_numbers = #tpu.dot_dimension_numbers<[1], [0], [0], [1], [0, 0, 1, 1], [], []>} : vector<8x128xbf16>, vector<128x32xbf16>, vector<8x32xf32> -> vector<8x32xf32>
    %52 = arith.addf %38, %51 : vector<8x32xf32>
    %53 = vector.broadcast %10 : vector<1x32xf32> to vector<8x32xf32>
    %54 = arith.addf %52, %53 : vector<8x32xf32>
    %cst_31 = arith.constant dense<0.000000e+00> : vector<8xf32>
    %55 = vector.multi_reduction <add>, %54, %cst_31 [1] : vector<8x32xf32> to vector<8xf32>
    %56 = vector.shape_cast %55 : vector<8xf32> to vector<8x1xf32>
    %cst_32 = arith.constant 3.200000e+01 : f32
    %57 = vector.broadcast %cst_32 : f32 to vector<8x1xf32>
    %58 = arith.divf %56, %57 : vector<8x1xf32>
    %59 = vector.broadcast %58 : vector<8x1xf32> to vector<8x32xf32>
    %60 = arith.subf %54, %59 : vector<8x32xf32>
    %61 = arith.mulf %60, %60 : vector<8x32xf32>
    %cst_33 = arith.constant dense<0.000000e+00> : vector<8xf32>
    %62 = vector.multi_reduction <add>, %61, %cst_33 [1] : vector<8x32xf32> to vector<8xf32>
    %63 = vector.shape_cast %62 : vector<8xf32> to vector<8x1xf32>
    %cst_34 = arith.constant 3.200000e+01 : f32
    %64 = vector.broadcast %cst_34 : f32 to vector<8x1xf32>
    %65 = arith.divf %63, %64 : vector<8x1xf32>
    %cst_35 = arith.constant 9.99999974E-6 : f32
    %66 = vector.broadcast %cst_35 : f32 to vector<8x1xf32>
    %67 = arith.addf %65, %66 : vector<8x1xf32>
    %68 = math.rsqrt %67 : vector<8x1xf32>
    %69 = vector.broadcast %68 : vector<8x1xf32> to vector<8x32xf32>
    %70 = arith.mulf %60, %69 : vector<8x32xf32>
    %71 = vector.broadcast %11 : vector<1x32xf32> to vector<8x32xf32>
    %72 = arith.mulf %70, %71 : vector<8x32xf32>
    %73 = vector.broadcast %12 : vector<1x32xf32> to vector<8x32xf32>
    %74 = arith.addf %72, %73 : vector<8x32xf32>
    %c7 = arith.constant 7 : index
    %c0_36 = arith.constant 0 : index
    %75 = vector.load %arg7[%c7, %c0_36] : memref<19x32xf32, #tpu.memory_space<vmem>>, vector<1x32xf32>
    %c8 = arith.constant 8 : index
    %c0_37 = arith.constant 0 : index
    %76 = vector.load %arg7[%c8, %c0_37] : memref<19x32xf32, #tpu.memory_space<vmem>>, vector<1x32xf32>
    %c9 = arith.constant 9 : index
    %c0_38 = arith.constant 0 : index
    %77 = vector.load %arg7[%c9, %c0_38] : memref<19x32xf32, #tpu.memory_space<vmem>>, vector<1x32xf32>
    %c10 = arith.constant 10 : index
    %c0_39 = arith.constant 0 : index
    %78 = vector.load %arg7[%c10, %c0_39] : memref<19x32xf32, #tpu.memory_space<vmem>>, vector<1x32xf32>
    %c11 = arith.constant 11 : index
    %c0_40 = arith.constant 0 : index
    %79 = vector.load %arg7[%c11, %c0_40] : memref<19x32xf32, #tpu.memory_space<vmem>>, vector<1x32xf32>
    %c12 = arith.constant 12 : index
    %c0_41 = arith.constant 0 : index
    %80 = vector.load %arg7[%c12, %c0_41] : memref<19x32xf32, #tpu.memory_space<vmem>>, vector<1x32xf32>
    %c1_42 = arith.constant 1 : index
    %c0_43 = arith.constant 0 : index
    %c0_44 = arith.constant 0 : index
    %81 = vector.load %arg3[%c1_42, %c0_43, %c0_44] : memref<3x32x32xbf16, #tpu.memory_space<vmem>>, vector<1x32x32xbf16>
    %82 = vector.shape_cast %81 : vector<1x32x32xbf16> to vector<32x32xbf16>
    %83 = arith.truncf %74 : vector<8x32xf32> to vector<8x32xbf16>
    %cst_45 = arith.constant dense<0.000000e+00> : vector<8x32xf32>
    %84 = tpu.matmul %83, %82, %cst_45 {dimension_numbers = #tpu.dot_dimension_numbers<[1], [0], [0], [1], [0, 0, 1, 1], [], []>} : vector<8x32xbf16>, vector<32x32xbf16>, vector<8x32xf32> -> vector<8x32xf32>
    %85 = vector.broadcast %75 : vector<1x32xf32> to vector<8x32xf32>
    %86 = arith.addf %84, %85 : vector<8x32xf32>
    %cst_46 = arith.constant dense<0.000000e+00> : vector<8xf32>
    %87 = vector.multi_reduction <add>, %86, %cst_46 [1] : vector<8x32xf32> to vector<8xf32>
    %88 = vector.shape_cast %87 : vector<8xf32> to vector<8x1xf32>
    %cst_47 = arith.constant 3.200000e+01 : f32
    %89 = vector.broadcast %cst_47 : f32 to vector<8x1xf32>
    %90 = arith.divf %88, %89 : vector<8x1xf32>
    %91 = vector.broadcast %90 : vector<8x1xf32> to vector<8x32xf32>
    %92 = arith.subf %86, %91 : vector<8x32xf32>
    %93 = arith.mulf %92, %92 : vector<8x32xf32>
    %cst_48 = arith.constant dense<0.000000e+00> : vector<8xf32>
    %94 = vector.multi_reduction <add>, %93, %cst_48 [1] : vector<8x32xf32> to vector<8xf32>
    %95 = vector.shape_cast %94 : vector<8xf32> to vector<8x1xf32>
    %cst_49 = arith.constant 3.200000e+01 : f32
    %96 = vector.broadcast %cst_49 : f32 to vector<8x1xf32>
    %97 = arith.divf %95, %96 : vector<8x1xf32>
    %cst_50 = arith.constant 9.99999974E-6 : f32
    %98 = vector.broadcast %cst_50 : f32 to vector<8x1xf32>
    %99 = arith.addf %97, %98 : vector<8x1xf32>
    %100 = math.rsqrt %99 : vector<8x1xf32>
    %101 = vector.broadcast %100 : vector<8x1xf32> to vector<8x32xf32>
    %102 = arith.mulf %92, %101 : vector<8x32xf32>
    %103 = vector.broadcast %76 : vector<1x32xf32> to vector<8x32xf32>
    %104 = arith.mulf %102, %103 : vector<8x32xf32>
    %105 = vector.broadcast %77 : vector<1x32xf32> to vector<8x32xf32>
    %106 = arith.addf %104, %105 : vector<8x32xf32>
    %c1_51 = arith.constant 1 : index
    %c0_52 = arith.constant 0 : index
    %c0_53 = arith.constant 0 : index
    %107 = vector.load %arg4[%c1_51, %c0_52, %c0_53] : memref<3x32x128xbf16, #tpu.memory_space<vmem>>, vector<1x32x128xbf16>
    %108 = vector.shape_cast %107 : vector<1x32x128xbf16> to vector<32x128xbf16>
    %109 = arith.truncf %106 : vector<8x32xf32> to vector<8x32xbf16>
    %cst_54 = arith.constant dense<0.000000e+00> : vector<8x128xf32>
    %110 = tpu.matmul %109, %108, %cst_54 {dimension_numbers = #tpu.dot_dimension_numbers<[1], [0], [0], [1], [0, 0, 1, 1], [], []>} : vector<8x32xbf16>, vector<32x128xbf16>, vector<8x128xf32> -> vector<8x128xf32>
    %c1_55 = arith.constant 1 : index
    %c0_56 = arith.constant 0 : index
    %111 = vector.load %arg8[%c1_55, %c0_56] : memref<3x128xf32, #tpu.memory_space<vmem>>, vector<1x128xf32>
    %112 = vector.broadcast %111 : vector<1x128xf32> to vector<8x128xf32>
    %113 = arith.addf %110, %112 : vector<8x128xf32>
    %cst_57 = arith.constant 0.000000e+00 : f32
    %114 = vector.broadcast %cst_57 : f32 to vector<8x128xf32>
    %115 = arith.maximumf %113, %114 : vector<8x128xf32>
    %c1_58 = arith.constant 1 : index
    %c0_59 = arith.constant 0 : index
    %c0_60 = arith.constant 0 : index
    %116 = vector.load %arg5[%c1_58, %c0_59, %c0_60] : memref<3x128x32xbf16, #tpu.memory_space<vmem>>, vector<1x128x32xbf16>
    %117 = vector.shape_cast %116 : vector<1x128x32xbf16> to vector<128x32xbf16>
    %118 = arith.truncf %115 : vector<8x128xf32> to vector<8x128xbf16>
    %cst_61 = arith.constant dense<0.000000e+00> : vector<8x32xf32>
    %119 = tpu.matmul %118, %117, %cst_61 {dimension_numbers = #tpu.dot_dimension_numbers<[1], [0], [0], [1], [0, 0, 1, 1], [], []>} : vector<8x128xbf16>, vector<128x32xbf16>, vector<8x32xf32> -> vector<8x32xf32>
    %120 = arith.addf %106, %119 : vector<8x32xf32>
    %121 = vector.broadcast %78 : vector<1x32xf32> to vector<8x32xf32>
    %122 = arith.addf %120, %121 : vector<8x32xf32>
    %cst_62 = arith.constant dense<0.000000e+00> : vector<8xf32>
    %123 = vector.multi_reduction <add>, %122, %cst_62 [1] : vector<8x32xf32> to vector<8xf32>
    %124 = vector.shape_cast %123 : vector<8xf32> to vector<8x1xf32>
    %cst_63 = arith.constant 3.200000e+01 : f32
    %125 = vector.broadcast %cst_63 : f32 to vector<8x1xf32>
    %126 = arith.divf %124, %125 : vector<8x1xf32>
    %127 = vector.broadcast %126 : vector<8x1xf32> to vector<8x32xf32>
    %128 = arith.subf %122, %127 : vector<8x32xf32>
    %129 = arith.mulf %128, %128 : vector<8x32xf32>
    %cst_64 = arith.constant dense<0.000000e+00> : vector<8xf32>
    %130 = vector.multi_reduction <add>, %129, %cst_64 [1] : vector<8x32xf32> to vector<8xf32>
    %131 = vector.shape_cast %130 : vector<8xf32> to vector<8x1xf32>
    %cst_65 = arith.constant 3.200000e+01 : f32
    %132 = vector.broadcast %cst_65 : f32 to vector<8x1xf32>
    %133 = arith.divf %131, %132 : vector<8x1xf32>
    %cst_66 = arith.constant 9.99999974E-6 : f32
    %134 = vector.broadcast %cst_66 : f32 to vector<8x1xf32>
    %135 = arith.addf %133, %134 : vector<8x1xf32>
    %136 = math.rsqrt %135 : vector<8x1xf32>
    %137 = vector.broadcast %136 : vector<8x1xf32> to vector<8x32xf32>
    %138 = arith.mulf %128, %137 : vector<8x32xf32>
    %139 = vector.broadcast %79 : vector<1x32xf32> to vector<8x32xf32>
    %140 = arith.mulf %138, %139 : vector<8x32xf32>
    %141 = vector.broadcast %80 : vector<1x32xf32> to vector<8x32xf32>
    %142 = arith.addf %140, %141 : vector<8x32xf32>
    %c13 = arith.constant 13 : index
    %c0_67 = arith.constant 0 : index
    %143 = vector.load %arg7[%c13, %c0_67] : memref<19x32xf32, #tpu.memory_space<vmem>>, vector<1x32xf32>
    %c14 = arith.constant 14 : index
    %c0_68 = arith.constant 0 : index
    %144 = vector.load %arg7[%c14, %c0_68] : memref<19x32xf32, #tpu.memory_space<vmem>>, vector<1x32xf32>
    %c15 = arith.constant 15 : index
    %c0_69 = arith.constant 0 : index
    %145 = vector.load %arg7[%c15, %c0_69] : memref<19x32xf32, #tpu.memory_space<vmem>>, vector<1x32xf32>
    %c16 = arith.constant 16 : index
    %c0_70 = arith.constant 0 : index
    %146 = vector.load %arg7[%c16, %c0_70] : memref<19x32xf32, #tpu.memory_space<vmem>>, vector<1x32xf32>
    %c17 = arith.constant 17 : index
    %c0_71 = arith.constant 0 : index
    %147 = vector.load %arg7[%c17, %c0_71] : memref<19x32xf32, #tpu.memory_space<vmem>>, vector<1x32xf32>
    %c18 = arith.constant 18 : index
    %c0_72 = arith.constant 0 : index
    %148 = vector.load %arg7[%c18, %c0_72] : memref<19x32xf32, #tpu.memory_space<vmem>>, vector<1x32xf32>
    %c2_73 = arith.constant 2 : index
    %c0_74 = arith.constant 0 : index
    %c0_75 = arith.constant 0 : index
    %149 = vector.load %arg3[%c2_73, %c0_74, %c0_75] : memref<3x32x32xbf16, #tpu.memory_space<vmem>>, vector<1x32x32xbf16>
    %150 = vector.shape_cast %149 : vector<1x32x32xbf16> to vector<32x32xbf16>
    %151 = arith.truncf %142 : vector<8x32xf32> to vector<8x32xbf16>
    %cst_76 = arith.constant dense<0.000000e+00> : vector<8x32xf32>
    %152 = tpu.matmul %151, %150, %cst_76 {dimension_numbers = #tpu.dot_dimension_numbers<[1], [0], [0], [1], [0, 0, 1, 1], [], []>} : vector<8x32xbf16>, vector<32x32xbf16>, vector<8x32xf32> -> vector<8x32xf32>
    %153 = vector.broadcast %143 : vector<1x32xf32> to vector<8x32xf32>
    %154 = arith.addf %152, %153 : vector<8x32xf32>
    %cst_77 = arith.constant dense<0.000000e+00> : vector<8xf32>
    %155 = vector.multi_reduction <add>, %154, %cst_77 [1] : vector<8x32xf32> to vector<8xf32>
    %156 = vector.shape_cast %155 : vector<8xf32> to vector<8x1xf32>
    %cst_78 = arith.constant 3.200000e+01 : f32
    %157 = vector.broadcast %cst_78 : f32 to vector<8x1xf32>
    %158 = arith.divf %156, %157 : vector<8x1xf32>
    %159 = vector.broadcast %158 : vector<8x1xf32> to vector<8x32xf32>
    %160 = arith.subf %154, %159 : vector<8x32xf32>
    %161 = arith.mulf %160, %160 : vector<8x32xf32>
    %cst_79 = arith.constant dense<0.000000e+00> : vector<8xf32>
    %162 = vector.multi_reduction <add>, %161, %cst_79 [1] : vector<8x32xf32> to vector<8xf32>
    %163 = vector.shape_cast %162 : vector<8xf32> to vector<8x1xf32>
    %cst_80 = arith.constant 3.200000e+01 : f32
    %164 = vector.broadcast %cst_80 : f32 to vector<8x1xf32>
    %165 = arith.divf %163, %164 : vector<8x1xf32>
    %cst_81 = arith.constant 9.99999974E-6 : f32
    %166 = vector.broadcast %cst_81 : f32 to vector<8x1xf32>
    %167 = arith.addf %165, %166 : vector<8x1xf32>
    %168 = math.rsqrt %167 : vector<8x1xf32>
    %169 = vector.broadcast %168 : vector<8x1xf32> to vector<8x32xf32>
    %170 = arith.mulf %160, %169 : vector<8x32xf32>
    %171 = vector.broadcast %144 : vector<1x32xf32> to vector<8x32xf32>
    %172 = arith.mulf %170, %171 : vector<8x32xf32>
    %173 = vector.broadcast %145 : vector<1x32xf32> to vector<8x32xf32>
    %174 = arith.addf %172, %173 : vector<8x32xf32>
    %c2_82 = arith.constant 2 : index
    %c0_83 = arith.constant 0 : index
    %c0_84 = arith.constant 0 : index
    %175 = vector.load %arg4[%c2_82, %c0_83, %c0_84] : memref<3x32x128xbf16, #tpu.memory_space<vmem>>, vector<1x32x128xbf16>
    %176 = vector.shape_cast %175 : vector<1x32x128xbf16> to vector<32x128xbf16>
    %177 = arith.truncf %174 : vector<8x32xf32> to vector<8x32xbf16>
    %cst_85 = arith.constant dense<0.000000e+00> : vector<8x128xf32>
    %178 = tpu.matmul %177, %176, %cst_85 {dimension_numbers = #tpu.dot_dimension_numbers<[1], [0], [0], [1], [0, 0, 1, 1], [], []>} : vector<8x32xbf16>, vector<32x128xbf16>, vector<8x128xf32> -> vector<8x128xf32>
    %c2_86 = arith.constant 2 : index
    %c0_87 = arith.constant 0 : index
    %179 = vector.load %arg8[%c2_86, %c0_87] : memref<3x128xf32, #tpu.memory_space<vmem>>, vector<1x128xf32>
    %180 = vector.broadcast %179 : vector<1x128xf32> to vector<8x128xf32>
    %181 = arith.addf %178, %180 : vector<8x128xf32>
    %cst_88 = arith.constant 0.000000e+00 : f32
    %182 = vector.broadcast %cst_88 : f32 to vector<8x128xf32>
    %183 = arith.maximumf %181, %182 : vector<8x128xf32>
    %c2_89 = arith.constant 2 : index
    %c0_90 = arith.constant 0 : index
    %c0_91 = arith.constant 0 : index
    %184 = vector.load %arg5[%c2_89, %c0_90, %c0_91] : memref<3x128x32xbf16, #tpu.memory_space<vmem>>, vector<1x128x32xbf16>
    %185 = vector.shape_cast %184 : vector<1x128x32xbf16> to vector<128x32xbf16>
    %186 = arith.truncf %183 : vector<8x128xf32> to vector<8x128xbf16>
    %cst_92 = arith.constant dense<0.000000e+00> : vector<8x32xf32>
    %187 = tpu.matmul %186, %185, %cst_92 {dimension_numbers = #tpu.dot_dimension_numbers<[1], [0], [0], [1], [0, 0, 1, 1], [], []>} : vector<8x128xbf16>, vector<128x32xbf16>, vector<8x32xf32> -> vector<8x32xf32>
    %188 = arith.addf %174, %187 : vector<8x32xf32>
    %189 = vector.broadcast %146 : vector<1x32xf32> to vector<8x32xf32>
    %190 = arith.addf %188, %189 : vector<8x32xf32>
    %cst_93 = arith.constant dense<0.000000e+00> : vector<8xf32>
    %191 = vector.multi_reduction <add>, %190, %cst_93 [1] : vector<8x32xf32> to vector<8xf32>
    %192 = vector.shape_cast %191 : vector<8xf32> to vector<8x1xf32>
    %cst_94 = arith.constant 3.200000e+01 : f32
    %193 = vector.broadcast %cst_94 : f32 to vector<8x1xf32>
    %194 = arith.divf %192, %193 : vector<8x1xf32>
    %195 = vector.broadcast %194 : vector<8x1xf32> to vector<8x32xf32>
    %196 = arith.subf %190, %195 : vector<8x32xf32>
    %197 = arith.mulf %196, %196 : vector<8x32xf32>
    %cst_95 = arith.constant dense<0.000000e+00> : vector<8xf32>
    %198 = vector.multi_reduction <add>, %197, %cst_95 [1] : vector<8x32xf32> to vector<8xf32>
    %199 = vector.shape_cast %198 : vector<8xf32> to vector<8x1xf32>
    %cst_96 = arith.constant 3.200000e+01 : f32
    %200 = vector.broadcast %cst_96 : f32 to vector<8x1xf32>
    %201 = arith.divf %199, %200 : vector<8x1xf32>
    %cst_97 = arith.constant 9.99999974E-6 : f32
    %202 = vector.broadcast %cst_97 : f32 to vector<8x1xf32>
    %203 = arith.addf %201, %202 : vector<8x1xf32>
    %204 = math.rsqrt %203 : vector<8x1xf32>
    %205 = vector.broadcast %204 : vector<8x1xf32> to vector<8x32xf32>
    %206 = arith.mulf %196, %205 : vector<8x32xf32>
    %207 = vector.broadcast %147 : vector<1x32xf32> to vector<8x32xf32>
    %208 = arith.mulf %206, %207 : vector<8x32xf32>
    %209 = vector.broadcast %148 : vector<1x32xf32> to vector<8x32xf32>
    %210 = arith.addf %208, %209 : vector<8x32xf32>
    %cst_98 = arith.constant dense<0.000000e+00> : vector<8xf32>
    %211 = vector.multi_reduction <add>, %210, %cst_98 [1] : vector<8x32xf32> to vector<8xf32>
    %212 = vector.shape_cast %211 : vector<8xf32> to vector<8x1xf32>
    %cst_99 = arith.constant 3.200000e+01 : f32
    %213 = vector.broadcast %cst_99 : f32 to vector<8x1xf32>
    %214 = arith.divf %212, %213 : vector<8x1xf32>
    %215 = vector.broadcast %214 : vector<8x1xf32> to vector<8x32xf32>
    %216 = arith.subf %210, %215 : vector<8x32xf32>
    %217 = arith.mulf %216, %216 : vector<8x32xf32>
    %cst_100 = arith.constant dense<0.000000e+00> : vector<8xf32>
    %218 = vector.multi_reduction <add>, %217, %cst_100 [1] : vector<8x32xf32> to vector<8xf32>
    %219 = vector.shape_cast %218 : vector<8xf32> to vector<8x1xf32>
    %cst_101 = arith.constant 3.200000e+01 : f32
    %220 = vector.broadcast %cst_101 : f32 to vector<8x1xf32>
    %221 = arith.divf %219, %220 : vector<8x1xf32>
    %cst_102 = arith.constant 9.99999974E-6 : f32
    %222 = vector.broadcast %cst_102 : f32 to vector<8x1xf32>
    %223 = arith.addf %221, %222 : vector<8x1xf32>
    %224 = math.rsqrt %223 : vector<8x1xf32>
    %225 = vector.broadcast %224 : vector<8x1xf32> to vector<8x32xf32>
    %226 = arith.mulf %216, %225 : vector<8x32xf32>
    %c0_103 = arith.constant 0 : index
    %c0_104 = arith.constant 0 : index
    %227 = vector.load %arg6[%c0_103, %c0_104] : memref<32x128xbf16, #tpu.memory_space<vmem>>, vector<32x128xbf16>
    %228 = arith.truncf %226 : vector<8x32xf32> to vector<8x32xbf16>
    %cst_105 = arith.constant dense<0.000000e+00> : vector<8x128xf32>
    %229 = tpu.matmul %228, %227, %cst_105 {dimension_numbers = #tpu.dot_dimension_numbers<[1], [0], [0], [1], [0, 0, 1, 1], [], []>} : vector<8x32xbf16>, vector<32x128xbf16>, vector<8x128xf32> -> vector<8x128xf32>
    %c0_106 = arith.constant 0 : index
    %c0_107 = arith.constant 0 : index
    %230 = vector.load %arg9[%c0_106, %c0_107] : memref<1x128xf32, #tpu.memory_space<vmem>>, vector<1x128xf32>
    %231 = vector.broadcast %230 : vector<1x128xf32> to vector<8x128xf32>
    %232 = arith.addf %229, %231 : vector<8x128xf32>
    %c0_108 = arith.constant 0 : index
    %c0_109 = arith.constant 0 : index
    %233 = vector.load %arg10[%c0_108, %c0_109] : memref<8x128xf32, #tpu.memory_space<vmem>>, vector<8x128xf32>
    tpu.vector_store %arg10[%c0_108, %c0_109], %232 {strides = array<i32>} : memref<8x128xf32, #tpu.memory_space<vmem>>, vector<8x128xf32>,
    return
  }
  func.func @transform_0(%arg0: i32) -> (i32, i32) {
    %c0_i32 = arith.constant 0 : i32
    %c0_i32_0 = arith.constant 0 : i32
    return %arg0, %c0_i32 : i32, i32
  }
  func.func @transform_1(%arg0: i32) -> (i32, i32) {
    %c0_i32 = arith.constant 0 : i32
    %c0_i32_0 = arith.constant 0 : i32
    %c0_i32_1 = arith.constant 0 : i32
    return %c0_i32, %c0_i32_0 : i32, i32
  }
  func.func @transform_2(%arg0: i32) -> (i32, i32, i32) {
    %c0_i32 = arith.constant 0 : i32
    %c0_i32_0 = arith.constant 0 : i32
    %c0_i32_1 = arith.constant 0 : i32
    %c0_i32_2 = arith.constant 0 : i32
    return %c0_i32, %c0_i32_0, %c0_i32_1 : i32, i32, i32
  }
  func.func @transform_3(%arg0: i32) -> (i32, i32, i32) {
    %c0_i32 = arith.constant 0 : i32
    %c0_i32_0 = arith.constant 0 : i32
    %c0_i32_1 = arith.constant 0 : i32
    %c0_i32_2 = arith.constant 0 : i32
    return %c0_i32, %c0_i32_0, %c0_i32_1 : i32, i32, i32
  }
  func.func @transform_4(%arg0: i32) -> (i32, i32, i32) {
    %c0_i32 = arith.constant 0 : i32
    %c0_i32_0 = arith.constant 0 : i32
    %c0_i32_1 = arith.constant 0 : i32
    %c0_i32_2 = arith.constant 0 : i32
    return %c0_i32, %c0_i32_0, %c0_i32_1 : i32, i32, i32
  }
  func.func @transform_5(%arg0: i32) -> (i32, i32) {
    %c0_i32 = arith.constant 0 : i32
    %c0_i32_0 = arith.constant 0 : i32
    %c0_i32_1 = arith.constant 0 : i32
    return %c0_i32, %c0_i32_0 : i32, i32
  }
  func.func @transform_6(%arg0: i32) -> (i32, i32) {
    %c0_i32 = arith.constant 0 : i32
    %c0_i32_0 = arith.constant 0 : i32
    %c0_i32_1 = arith.constant 0 : i32
    return %c0_i32, %c0_i32_0 : i32, i32
  }
  func.func @transform_7(%arg0: i32) -> (i32, i32) {
    %c0_i32 = arith.constant 0 : i32
    %c0_i32_0 = arith.constant 0 : i32
    %c0_i32_1 = arith.constant 0 : i32
    return %c0_i32, %c0_i32_0 : i32, i32
  }
  func.func @transform_8(%arg0: i32) -> (i32, i32) {
    %c0_i32 = arith.constant 0 : i32
    %c0_i32_0 = arith.constant 0 : i32
    %c0_i32_1 = arith.constant 0 : i32
    return %c0_i32, %c0_i32_0 : i32, i32
  }
  func.func @transform_9(%arg0: i32) -> (i32, i32) {
    %c0_i32 = arith.constant 0 : i32
    %c0_i32_0 = arith.constant 0 : i32
    return %arg0, %c0_i32 : i32, i32
  }
}

</mosaic_0001>

<llo_original>
// kernel: music_mood_forward.1
$region0: #{music_mood_forward.1}
  #allocation0 [shape = 'u32[]', space=smem, size = 0x4, offset = 0x4, fixed_abs, tag = 'smem constant byte address 0x4 - core index']
  #allocation1 [shape = 'u32[144,128]{1,0:T(1,128)}', space=vmem, size = 0x12000, scoped, tag = 'internal scratch']
  %s0 = inlined_call_operand.vmem [shape: f32[8,416], index: 0, kind: input, shape index: {}]
  %s1 = inlined_call_operand.vmem [shape: bf16[416,32], index: 1, kind: input, shape index: {}]
  %s2 = inlined_call_operand.vmem [shape: bf16[3,32,32], index: 2, kind: input, shape index: {}]
  %s3 = inlined_call_operand.vmem [shape: bf16[3,32,128], index: 3, kind: input, shape index: {}]
  %s4 = inlined_call_operand.vmem [shape: bf16[3,128,32], index: 4, kind: input, shape index: {}]
  %s5 = inlined_call_operand.vmem [shape: bf16[32,128], index: 5, kind: input, shape index: {}]
  %s6 = inlined_call_operand.vmem [shape: f32[19,32], index: 6, kind: input, shape index: {}]
  %s7 = inlined_call_operand.vmem [shape: f32[3,128], index: 7, kind: input, shape index: {}]
  %s8 = inlined_call_operand.vmem [shape: f32[1,128], index: 8, kind: input, shape index: {}]
  %s9 = inlined_call_operand.vmem [shape: f32[8,128], index: 9, kind: output, shape index: {}]
  %s10 = sld [smem:[#allocation0]]
  $region46: #{music_mood_forward.1} parent=0
    _
  %s12 = ssub.s32 1, %s10
  %s13 = scalar_select 0, %s12, %s10
  // Predicated region
  $region2: #{music_mood_forward.1} parent=0 // pred_check
    _
  $region3: #{music_mood_forward.1} parent=0 // pred_check_branch
    %15 = sbr.rel (0) target = $region5
  $region4: #{music_mood_forward.1} parent=0 // pred_region
    _
  $region5: #{music_mood_forward.1} parent=0 // pred_fallthru
    _
  // Predicated region
  $region6: #{music_mood_forward.1} parent=0 // pred_check
    _
  $region7: #{music_mood_forward.1} parent=0 // pred_check_branch
    %17 = sbr.rel (0) target = $region9
  $region8: #{music_mood_forward.1} parent=0 // pred_region
    _
  $region9: #{music_mood_forward.1} parent=0 // pred_fallthru
    _
  // Predicated region
  $region10: #{music_mood_forward.1} parent=0 // pred_check
    _
  $region11: #{music_mood_forward.1} parent=0 // pred_check_branch
    %19 = sbr.rel (0) target = $region13
  $region12: #{music_mood_forward.1} parent=0 // pred_region
    _
  $region13: #{music_mood_forward.1} parent=0 // pred_fallthru
    _
  // Predicated region
  $region14: #{music_mood_forward.1} parent=0 // pred_check
    _
  $region15: #{music_mood_forward.1} parent=0 // pred_check_branch
    %21 = sbr.rel (0) target = $region17
  $region16: #{music_mood_forward.1} parent=0 // pred_region
    _
  $region17: #{music_mood_forward.1} parent=0 // pred_fallthru
    _
  // Predicated region
  $region18: #{music_mood_forward.1} parent=0 // pred_check
    _
  $region19: #{music_mood_forward.1} parent=0 // pred_check_branch
    %23 = sbr.rel (0) target = $region21
  $region20: #{music_mood_forward.1} parent=0 // pred_region
    _
  $region21: #{music_mood_forward.1} parent=0 // pred_fallthru
    _
  // Predicated region
  $region22: #{music_mood_forward.1} parent=0 // pred_check
    _
  $region23: #{music_mood_forward.1} parent=0 // pred_check_branch
    %25 = sbr.rel (0) target = $region25
  $region24: #{music_mood_forward.1} parent=0 // pred_region
    _
  $region25: #{music_mood_forward.1} parent=0 // pred_fallthru
    _
  // Predicated region
  $region26: #{music_mood_forward.1} parent=0 // pred_check
    _
  $region27: #{music_mood_forward.1} parent=0 // pred_check_branch
    %27 = sbr.rel (0) target = $region29
  $region28: #{music_mood_forward.1} parent=0 // pred_region
    _
  $region29: #{music_mood_forward.1} parent=0 // pred_fallthru
    _
  // Predicated region
  $region30: #{music_mood_forward.1} parent=0 // pred_check
    _
  $region31: #{music_mood_forward.1} parent=0 // pred_check_branch
    %29 = sbr.rel (0) target = $region33
  $region32: #{music_mood_forward.1} parent=0 // pred_region
    _
  $region33: #{music_mood_forward.1} parent=0 // pred_fallthru
    _
  // Predicated region
  $region34: #{music_mood_forward.1} parent=0 // pred_check
    _
  $region35: #{music_mood_forward.1} parent=0 // pred_check_branch
    %31 = sbr.rel (0) target = $region37
  $region36: #{music_mood_forward.1} parent=0 // pred_region
    _
  $region37: #{music_mood_forward.1} parent=0 // pred_fallthru
    _
  %v33 = vld [vmem:[%s6] sm:$0x1]
  %v34 = vld [vmem:[%s0] sm:$0xff]
  %v35 = vld [vmem:[%s0 + $0x8] sm:$0xff]
  %v36 = vld [vmem:[%s0 + $0x10] sm:$0xff]
  %v37 = vld [vmem:[%s0 + $0x18] sm:$0xff]
  %v38 = vld [vmem:[%s1] sm:$0xf]
  %v39 = vld [vmem:[%s1 + $0x4] sm:$0xf]
  %v40 = vld [vmem:[%s1 + $0x8] sm:$0xf]
  %v41 = vld [vmem:[%s1 + $0xc] sm:$0xf]
  %v42 = vld [vmem:[%s1 + $0x10] sm:$0xf]
  %v43 = vld [vmem:[%s1 + $0x14] sm:$0xf]
  %v44 = vld [vmem:[%s1 + $0x18] sm:$0xf]
  %v45 = vld [vmem:[%s1 + $0x1c] sm:$0xf]
  %v46 = vld [vmem:[%s1 + $0x20] sm:$0xf]
  %v47 = vld [vmem:[%s1 + $0x24] sm:$0xf]
  %v48 = vld [vmem:[%s1 + $0x28] sm:$0xf]
  %v49 = vld [vmem:[%s1 + $0x2c] sm:$0xf]
  %v50 = vld [vmem:[%s1 + $0x30] sm:$0xf]
  %v51 = vld [vmem:[%s1 + $0x34] sm:$0xf]
  %v52 = vld [vmem:[%s1 + $0x38] sm:$0xf]
  %v53 = vld [vmem:[%s1 + $0x3c] sm:$0xf]
  %v54 = vld [vmem:[%s1 + $0x40] sm:$0xf]
  %v55 = vld [vmem:[%s1 + $0x44] sm:$0xf]
  %v56 = vld [vmem:[%s1 + $0x48] sm:$0xf]
  %v57 = vld [vmem:[%s1 + $0x4c] sm:$0xf]
  %v58 = vld [vmem:[%s1 + $0x50] sm:$0xf]
  %v59 = vld [vmem:[%s1 + $0x54] sm:$0xf]
  %v60 = vld [vmem:[%s1 + $0x58] sm:$0xf]
  %v61 = vld [vmem:[%s1 + $0x5c] sm:$0xf]
  %v62 = vld [vmem:[%s1 + $0x60] sm:$0xf]
  %v63 = vld [vmem:[%s1 + $0x64] sm:$0xf]
  %v64 = vld [vmem:[%s1 + $0x68] sm:$0xf]
  %v65 = vld [vmem:[%s1 + $0x6c] sm:$0xf]
  %v66 = vld [vmem:[%s1 + $0x70] sm:$0xf]
  %v67 = vld [vmem:[%s1 + $0x74] sm:$0xf]
  %v68 = vld [vmem:[%s1 + $0x78] sm:$0xf]
  %v69 = vld [vmem:[%s1 + $0x7c] sm:$0xf]
  %v70 = vld [vmem:[%s1 + $0x80] sm:$0xf]
  %v71 = vld [vmem:[%s1 + $0x84] sm:$0xf]
  %v72 = vld [vmem:[%s1 + $0x88] sm:$0xf]
  %v73 = vld [vmem:[%s1 + $0x8c] sm:$0xf]
  %v74 = vld [vmem:[%s1 + $0x90] sm:$0xf]
  %v75 = vld [vmem:[%s1 + $0x94] sm:$0xf]
  %v76 = vld [vmem:[%s1 + $0x98] sm:$0xf]
  %v77 = vld [vmem:[%s1 + $0x9c] sm:$0xf]
  %v78 = vld [vmem:[%s1 + $0xa0] sm:$0xf]
  %v79 = vld [vmem:[%s1 + $0xa4] sm:$0xf]
  %v80 = vld [vmem:[%s1 + $0xa8] sm:$0xf]
  %v81 = vld [vmem:[%s1 + $0xac] sm:$0xf]
  %v82 = vld [vmem:[%s1 + $0xb0] sm:$0xf]
  %v83 = vld [vmem:[%s1 + $0xb4] sm:$0xf]
  %v84 = vld [vmem:[%s1 + $0xb8] sm:$0xf]
  %v85 = vld [vmem:[%s1 + $0xbc] sm:$0xf]
  %v86 = vld [vmem:[%s1 + $0xc0] sm:$0xf]
  %v87 = vld [vmem:[%s1 + $0xc4] sm:$0xf]
  %v88 = vld [vmem:[%s1 + $0xc8] sm:$0xf]
  %v89 = vld [vmem:[%s1 + $0xcc] sm:$0xf]
  %v90 = vpack.c.bf16 %v34, %v34
  %v91 = vpack.c.bf16 %v35, %v35
  %v92 = vpack.c.bf16 %v36, %v36
  %v93 = vpack.c.bf16 %v37, %v37
  %v94 = vlaneseq
  %v95 = vshrl.u32 %v94, 7
  %v96 = vsub.s32 0, %v95
  %v97 = vrot.slane %v33, %v96
  %v150 = vunpack.c.l.b16 %v38
  %v151 = vunpack.c.l.b16 %v39
  %v152 = vunpack.c.l.b16 %v40
  %v153 = vunpack.c.l.b16 %v41
  %v154 = vunpack.c.l.b16 %v42
  %v155 = vunpack.c.l.b16 %v43
  %v156 = vunpack.c.l.b16 %v44
  %v157 = vunpack.c.l.b16 %v45
  %v158 = vunpack.c.l.b16 %v46
  %v159 = vunpack.c.l.b16 %v47
  %v160 = vunpack.c.l.b16 %v48
  %v161 = vunpack.c.l.b16 %v49
  %v162 = vunpack.c.l.b16 %v50
  %v163 = vunpack.c.l.b16 %v51
  %v164 = vunpack.c.l.b16 %v52
  %v165 = vunpack.c.l.b16 %v53
  %v166 = vunpack.c.l.b16 %v54
  %v167 = vunpack.c.l.b16 %v55
  %v168 = vunpack.c.l.b16 %v56
  %v169 = vunpack.c.l.b16 %v57
  %v170 = vunpack.c.l.b16 %v58
  %v171 = vunpack.c.l.b16 %v59
  %v172 = vunpack.c.l.b16 %v60
  %v173 = vunpack.c.l.b16 %v61
  %v174 = vunpack.c.l.b16 %v62
  %v175 = vunpack.c.l.b16 %v63
  %v176 = vunpack.c.l.b16 %v64
  %v177 = vunpack.c.l.b16 %v65
  %v178 = vunpack.c.l.b16 %v66
  %v179 = vunpack.c.l.b16 %v67
  %v180 = vunpack.c.l.b16 %v68
  %v181 = vunpack.c.l.b16 %v69
  %v182 = vunpack.c.l.b16 %v70
  %v183 = vunpack.c.l.b16 %v71
  %v184 = vunpack.c.l.b16 %v72
  %v185 = vunpack.c.l.b16 %v73
  %v186 = vunpack.c.l.b16 %v74
  %v187 = vunpack.c.l.b16 %v75
  %v188 = vunpack.c.l.b16 %v76
  %v189 = vunpack.c.l.b16 %v77
  %v190 = vunpack.c.l.b16 %v78
  %v191 = vunpack.c.l.b16 %v79
  %v192 = vunpack.c.l.b16 %v80
  %v193 = vunpack.c.l.b16 %v81
  %v194 = vunpack.c.l.b16 %v82
  %v195 = vunpack.c.l.b16 %v83
  %v196 = vunpack.c.l.b16 %v84
  %v197 = vunpack.c.l.b16 %v85
  %v198 = vunpack.c.l.b16 %v86
  %v199 = vunpack.c.l.b16 %v87
  %v200 = vunpack.c.l.b16 %v88
  %v201 = vunpack.c.l.b16 %v89
  %v202 = vpack.c.b16 %v151, %v150
  %v203 = vpack.c.b16 %v153, %v152
  %v204 = vpack.c.b16 %v155, %v154
  %v205 = vpack.c.b16 %v157, %v156
  %v206 = vpack.c.b16 %v159, %v158
  %v207 = vpack.c.b16 %v161, %v160
  %v208 = vpack.c.b16 %v163, %v162
  %v209 = vpack.c.b16 %v165, %v164
  %v210 = vpack.c.b16 %v167, %v166
  %v211 = vpack.c.b16 %v169, %v168
  %v212 = vpack.c.b16 %v171, %v170
  %v213 = vpack.c.b16 %v173, %v172
  %v214 = vpack.c.b16 %v175, %v174
  %v215 = vpack.c.b16 %v177, %v176
  %v216 = vpack.c.b16 %v179, %v178
  %v217 = vpack.c.b16 %v181, %v180
  %v218 = vpack.c.b16 %v183, %v182
  %v219 = vpack.c.b16 %v185, %v184
  %v220 = vpack.c.b16 %v187, %v186
  %v221 = vpack.c.b16 %v189, %v188
  %v222 = vpack.c.b16 %v191, %v190
  %v223 = vpack.c.b16 %v193, %v192
  %v224 = vpack.c.b16 %v195, %v194
  %v225 = vpack.c.b16 %v197, %v196
  %v226 = vpack.c.b16 %v199, %v198
  %v227 = vpack.c.b16 %v201, %v200
  %vm254 = vcmask 261120
  %v256 = vsel %vm254, %v93, 0
  %258 = vmatprep.subr.bf16.mxu0 0
  %259 = vmatpush1.bf16.msra.mxu0 %v209
  %260 = vmatprep.subr.bf16.mxu0 0
  %261 = vmatpush1.bf16.msra.mxu0 %v208
  %262 = vmatprep.subr.bf16.mxu0 0
  %263 = vmatpush1.bf16.msra.mxu0 %v207
  %264 = vmatprep.subr.bf16.mxu0 0
  %265 = vmatpush1.bf16.msra.mxu0 %v206
  %266 = vmatprep.subr.bf16.mxu0 0
  %267 = vmatpush1.bf16.msra.mxu0 %v205
  %268 = vmatprep.subr.bf16.mxu0 0
  %269 = vmatpush1.bf16.msra.mxu0 %v204
  %270 = vmatprep.subr.bf16.mxu0 0
  %271 = vmatpush1.bf16.msra.mxu0 %v203
  %272 = vmatprep.subr.bf16.mxu0 0
  %273 = vmatpush1.bf16.msra.mxu0 %v202
  %274 = vmatprep.subr.bf16.mxu0 0
  %275 = vmatpush2.bf16.msra.mxu0 %v217
  %276 = vmatprep.subr.bf16.mxu0 0
  %277 = vmatpush2.bf16.msra.mxu0 %v216
  %278 = vmatprep.subr.bf16.mxu0 0
  %279 = vmatpush2.bf16.msra.mxu0 %v215
  %280 = vmatprep.subr.bf16.mxu0 0
  %281 = vmatpush2.bf16.msra.mxu0 %v214
  %282 = vmatprep.subr.bf16.mxu0 0
  %283 = vmatpush2.bf16.msra.mxu0 %v213
  %284 = vmatprep.subr.bf16.mxu0 0
  %285 = vmatpush2.bf16.msra.mxu0 %v212
  %286 = vmatprep.subr.bf16.mxu0 0
  %287 = vmatpush2.bf16.msra.mxu0 %v211
  %288 = vmatprep.subr.bf16.mxu0 0
  %289 = vmatpush2.bf16.msra.mxu0 %v210
  %290 = vmatprep.mubr.bf16.mxu0 %v91
  %291 = vmatmul.mubr.bf16.gmra.mxu0 %v90
  %v292 = vpop.f32.mrf.mxu0
  %v293 = vadd.f32 %v97, %v292
  %v294 = vpop.f32.mrf.mxu0
  %v295 = vpop.f32.mrf.mxu0
  %v296 = vpop.f32.mrf.mxu0
  %297 = vdwg.mxu0
  %298 = vmatprep.subr.bf16.mxu0 0
  %299 = vmatpush1.bf16.msra.mxu0 %v225
  %300 = vmatprep.subr.bf16.mxu0 0
  %301 = vmatpush1.bf16.msra.mxu0 %v224
  %302 = vmatprep.subr.bf16.mxu0 0
  %303 = vmatpush1.bf16.msra.mxu0 %v223
  %304 = vmatprep.subr.bf16.mxu0 0
  %305 = vmatpush1.bf16.msra.mxu0 %v222
  %306 = vmatprep.subr.bf16.mxu0 0
  %307 = vmatpush1.bf16.msra.mxu0 %v221
  %308 = vmatprep.subr.bf16.mxu0 0
  %309 = vmatpush1.bf16.msra.mxu0 %v220
  %310 = vmatprep.subr.bf16.mxu0 0
  %311 = vmatpush1.bf16.msra.mxu0 %v219
  %312 = vmatprep.subr.bf16.mxu0 0
  %313 = vmatpush1.bf16.msra.mxu0 %v218
  %314 = vmatprep.subr.bf16.mxu0 0
  %315 = vmatpush2.bf16.msra.mxu0 0
  %316 = vmatprep.subr.bf16.mxu0 0
  %317 = vmatpush2.bf16.msra.mxu0 0
  %318 = vmatprep.subr.bf16.mxu0 0
  %319 = vmatpush2.bf16.msra.mxu0 0
  %320 = vmatprep.subr.bf16.mxu0 0
  %321 = vmatpush2.bf16.msra.mxu0 0
  %322 = vmatprep.subr.bf16.mxu0 0
  %323 = vmatpush2.bf16.msra.mxu0 0
  %324 = vmatprep.subr.bf16.mxu0 0
  %325 = vmatpush2.bf16.msra.mxu0 0
  %326 = vmatprep.subr.bf16.mxu0 0
  %327 = vmatpush2.bf16.msra.mxu0 %v227
  %328 = vmatprep.subr.bf16.mxu0 0
  %329 = vmatpush2.bf16.msra.mxu0 %v226
  %330 = vmatprep.mubr.bf16.mxu0 %v256
  %331 = vmatmul.mubr.bf16.gmra.mxu0 %v92
  %v332 = vpop.f32.mrf.mxu0
  %v333 = vadd.f32 %v293, %v332
  %v334 = vpop.f32.mrf.mxu0
  %v335 = vpop.f32.mrf.mxu0
  %v336 = vpop.f32.mrf.mxu0
  %337 = vdwg.mxu0
  %v338 = vld [vmem:[%s6 + $0x1] sm:$0x1]
  %v339 = vld [vmem:[%s6 + $0x2] sm:$0x1]
  %v340 = vld [vmem:[%s6 + $0x3] sm:$0x1]
  %v341 = vld [vmem:[%s6 + $0x4] sm:$0x1]
  %v342 = vld [vmem:[%s6 + $0x5] sm:$0x1]
  %v343 = vld [vmem:[%s6 + $0x6] sm:$0x1]
  %v344 = vld [vmem:[%s2] sm:$0xf]
  %v345 = vld [vmem:[%s2 + $0x4] sm:$0xf]
  %v346 = vld [vmem:[%s2 + $0x8] sm:$0xf]
  %v347 = vld [vmem:[%s2 + $0xc] sm:$0xf]
  %v348 = vpack.c.bf16 %v333, %v333
  %v349 = vlaneseq
  %v350 = vshrl.u32 %v349, 7
  %v351 = vsub.s32 0, %v350
  %v352 = vrot.slane %v338, %v351
  %v357 = vunpack.c.l.b16 %v344
  %v358 = vunpack.c.l.b16 %v345
  %v359 = vunpack.c.l.b16 %v346
  %v360 = vunpack.c.l.b16 %v347
  %v361 = vpack.c.b16 %v358, %v357
  %v362 = vpack.c.b16 %v360, %v359
  %v366 = vsel %vm254, %v348, 0
  %368 = vmatprep.subr.bf16.mxu0 0
  %369 = vmatpush1.bf16.msra.mxu0 0
  %370 = vmatprep.subr.bf16.mxu0 0
  %371 = vmatpush1.bf16.msra.mxu0 0
  %372 = vmatprep.subr.bf16.mxu0 0
  %373 = vmatpush1.bf16.msra.mxu0 0
  %374 = vmatprep.subr.bf16.mxu0 0
  %375 = vmatpush1.bf16.msra.mxu0 0
  %376 = vmatprep.subr.bf16.mxu0 0
  %377 = vmatpush1.bf16.msra.mxu0 0
  %378 = vmatprep.subr.bf16.mxu0 0
  %379 = vmatpush1.bf16.msra.mxu0 0
  %380 = vmatprep.subr.bf16.mxu0 0
  %381 = vmatpush1.bf16.msra.mxu0 %v362
  %382 = vmatprep.subr.bf16.mxu0 0
  %383 = vmatpush1.bf16.msra.mxu0 %v361
  %384 = vmatprep.subr.bf16.mxu0 0
  %385 = vmatpush2.bf16.msra.mxu0 0
  %386 = vmatprep.subr.bf16.mxu0 0
  %387 = vmatpush2.bf16.msra.mxu0 0
  %388 = vmatprep.subr.bf16.mxu0 0
  %389 = vmatpush2.bf16.msra.mxu0 0
  %390 = vmatprep.subr.bf16.mxu0 0
  %391 = vmatpush2.bf16.msra.mxu0 0
  %392 = vmatprep.subr.bf16.mxu0 0
  %393 = vmatpush2.bf16.msra.mxu0 0
  %394 = vmatprep.subr.bf16.mxu0 0
  %395 = vmatpush2.bf16.msra.mxu0 0
  %396 = vmatprep.subr.bf16.mxu0 0
  %397 = vmatpush2.bf16.msra.mxu0 0
  %398 = vmatprep.subr.bf16.mxu0 0
  %399 = vmatpush2.bf16.msra.mxu0 0
  %400 = vmatprep.mubr.bf16.mxu0 0
  %401 = vmatmul.mubr.bf16.gmra.mxu0 %v366
  %v402 = vpop.f32.mrf.mxu0
  %v403 = vadd.f32 %v352, %v402
  %v404 = vpop.f32.mrf.mxu0
  %v405 = vpop.f32.mrf.mxu0
  %v406 = vpop.f32.mrf.mxu0
  %407 = vdwg.mxu0
  %v408 = vsel %vm254, %v403, 0.0
  %409 = vadd.xlane.f32.xlu0 %v408
  %v410 = vpop.xlane.xlu0 %409
  %v411 = vrcp.pop 32.0
  %v412 = vmul.f32 %v410, %v411
  %v413 = vsub.f32 %v403, %v412
  %v414 = vmul.f32 %v413, %v413
  %v415 = vsel %vm254, %v414, 0.0
  %416 = vadd.xlane.f32.xlu0 %v415
  %v417 = vpop.xlane.xlu0 %416
  %v418 = vmul.f32 %v417, %v411
  %v419 = vadd.f32 %v418, 1e-05
  %v420 = vrsqrt.pop %v419
  %v421 = vmul.f32 %v413, %v420
  %v422 = vlaneseq
  %v423 = vshrl.u32 %v422, 7
  %v424 = vsub.s32 0, %v423
  %v425 = vrot.slane %v339, %v424
  %v426 = vmul.f32 %v421, %v425
  %v427 = vlaneseq
  %v428 = vshrl.u32 %v427, 7
  %v429 = vsub.s32 0, %v428
  %v430 = vrot.slane %v340, %v429
  %v431 = vadd.f32 %v426, %v430
  %v432 = vld [vmem:[%s3] sm:$0xf]
  %v433 = vld [vmem:[%s3 + $0x4] sm:$0xf]
  %v434 = vld [vmem:[%s3 + $0x8] sm:$0xf]
  %v435 = vld [vmem:[%s3 + $0xc] sm:$0xf]
  %v436 = vpack.c.bf16 %v431, %v431
  %v437 = vld [vmem:[%s7] sm:$0x1]
  %v438 = vlaneseq
  %v439 = vshrl.u32 %v438, 7
  %v440 = vsub.s32 0, %v439
  %v441 = vrot.slane %v437, %v440
  %v446 = vunpack.c.l.b16 %v432
  %v447 = vunpack.c.l.b16 %v433
  %v448 = vunpack.c.l.b16 %v434
  %v449 = vunpack.c.l.b16 %v435
  %v450 = vpack.c.b16 %v447, %v446
  %v451 = vpack.c.b16 %v449, %v448
  %v455 = vsel %vm254, %v436, 0
  %457 = vmatprep.subr.bf16.mxu0 0
  %458 = vmatpush1.bf16.msra.mxu0 0
  %459 = vmatprep.subr.bf16.mxu0 0
  %460 = vmatpush1.bf16.msra.mxu0 0
  %461 = vmatprep.subr.bf16.mxu0 0
  %462 = vmatpush1.bf16.msra.mxu0 0
  %463 = vmatprep.subr.bf16.mxu0 0
  %464 = vmatpush1.bf16.msra.mxu0 0
  %465 = vmatprep.subr.bf16.mxu0 0
  %466 = vmatpush1.bf16.msra.mxu0 0
  %467 = vmatprep.subr.bf16.mxu0 0
  %468 = vmatpush1.bf16.msra.mxu0 0
  %469 = vmatprep.subr.bf16.mxu0 0
  %470 = vmatpush1.bf16.msra.mxu0 %v451
  %471 = vmatprep.subr.bf16.mxu0 0
  %472 = vmatpush1.bf16.msra.mxu0 %v450
  %473 = vmatprep.subr.bf16.mxu0 0
  %474 = vmatpush2.bf16.msra.mxu0 0
  %475 = vmatprep.subr.bf16.mxu0 0
  %476 = vmatpush2.bf16.msra.mxu0 0
  %477 = vmatprep.subr.bf16.mxu0 0
  %478 = vmatpush2.bf16.msra.mxu0 0
  %479 = vmatprep.subr.bf16.mxu0 0
  %480 = vmatpush2.bf16.msra.mxu0 0
  %481 = vmatprep.subr.bf16.mxu0 0
  %482 = vmatpush2.bf16.msra.mxu0 0
  %483 = vmatprep.subr.bf16.mxu0 0
  %484 = vmatpush2.bf16.msra.mxu0 0
  %485 = vmatprep.subr.bf16.mxu0 0
  %486 = vmatpush2.bf16.msra.mxu0 0
  %487 = vmatprep.subr.bf16.mxu0 0
  %488 = vmatpush2.bf16.msra.mxu0 0
  %489 = vmatprep.mubr.bf16.mxu0 0
  %490 = vmatmul.mubr.bf16.gmra.mxu0 %v455
  %v491 = vpop.f32.mrf.mxu0
  %v492 = vadd.f32 %v441, %v491
  %v493 = vpop.f32.mrf.mxu0
  %v494 = vpop.f32.mrf.mxu0
  %v495 = vpop.f32.mrf.mxu0
  %496 = vdwg.mxu0
  %v497 = vmax.f32 %v492, 0.0
  %v498 = vld [vmem:[%s4] sm:$0xf]
  %v499 = vld [vmem:[%s4 + $0x4] sm:$0xf]
  %v500 = vld [vmem:[%s4 + $0x8] sm:$0xf]
  %v501 = vld [vmem:[%s4 + $0xc] sm:$0xf]
  %v502 = vld [vmem:[%s4 + $0x10] sm:$0xf]
  %v503 = vld [vmem:[%s4 + $0x14] sm:$0xf]
  %v504 = vld [vmem:[%s4 + $0x18] sm:$0xf]
  %v505 = vld [vmem:[%s4 + $0x1c] sm:$0xf]
  %v506 = vld [vmem:[%s4 + $0x20] sm:$0xf]
  %v507 = vld [vmem:[%s4 + $0x24] sm:$0xf]
  %v508 = vld [vmem:[%s4 + $0x28] sm:$0xf]
  %v509 = vld [vmem:[%s4 + $0x2c] sm:$0xf]
  %v510 = vld [vmem:[%s4 + $0x30] sm:$0xf]
  %v511 = vld [vmem:[%s4 + $0x34] sm:$0xf]
  %v512 = vld [vmem:[%s4 + $0x38] sm:$0xf]
  %v513 = vld [vmem:[%s4 + $0x3c] sm:$0xf]
  %v514 = vpack.c.bf16 %v497, %v497
  %v531 = vunpack.c.l.b16 %v498
  %v532 = vunpack.c.l.b16 %v499
  %v533 = vunpack.c.l.b16 %v500
  %v534 = vunpack.c.l.b16 %v501
  %v535 = vunpack.c.l.b16 %v502
  %v536 = vunpack.c.l.b16 %v503
  %v537 = vunpack.c.l.b16 %v504
  %v538 = vunpack.c.l.b16 %v505
  %v539 = vunpack.c.l.b16 %v506
  %v540 = vunpack.c.l.b16 %v507
  %v541 = vunpack.c.l.b16 %v508
  %v542 = vunpack.c.l.b16 %v509
  %v543 = vunpack.c.l.b16 %v510
  %v544 = vunpack.c.l.b16 %v511
  %v545 = vunpack.c.l.b16 %v512
  %v546 = vunpack.c.l.b16 %v513
  %v547 = vpack.c.b16 %v532, %v531
  %v548 = vpack.c.b16 %v534, %v533
  %v549 = vpack.c.b16 %v536, %v535
  %v550 = vpack.c.b16 %v538, %v537
  %v551 = vpack.c.b16 %v540, %v539
  %v552 = vpack.c.b16 %v542, %v541
  %v553 = vpack.c.b16 %v544, %v543
  %v554 = vpack.c.b16 %v546, %v545
  %563 = vmatprep.subr.bf16.mxu0 0
  %564 = vmatpush1.bf16.msra.mxu0 %v554
  %565 = vmatprep.subr.bf16.mxu0 0
  %566 = vmatpush1.bf16.msra.mxu0 %v553
  %567 = vmatprep.subr.bf16.mxu0 0
  %568 = vmatpush1.bf16.msra.mxu0 %v552
  %569 = vmatprep.subr.bf16.mxu0 0
  %570 = vmatpush1.bf16.msra.mxu0 %v551
  %571 = vmatprep.subr.bf16.mxu0 0
  %572 = vmatpush1.bf16.msra.mxu0 %v550
  %573 = vmatprep.subr.bf16.mxu0 0
  %574 = vmatpush1.bf16.msra.mxu0 %v549
  %575 = vmatprep.subr.bf16.mxu0 0
  %576 = vmatpush1.bf16.msra.mxu0 %v548
  %577 = vmatprep.subr.bf16.mxu0 0
  %578 = vmatpush1.bf16.msra.mxu0 %v547
  %579 = vmatprep.subr.bf16.mxu0 0
  %580 = vmatpush2.bf16.msra.mxu0 0
  %581 = vmatprep.subr.bf16.mxu0 0
  %582 = vmatpush2.bf16.msra.mxu0 0
  %583 = vmatprep.subr.bf16.mxu0 0
  %584 = vmatpush2.bf16.msra.mxu0 0
  %585 = vmatprep.subr.bf16.mxu0 0
  %586 = vmatpush2.bf16.msra.mxu0 0
  %587 = vmatprep.subr.bf16.mxu0 0
  %588 = vmatpush2.bf16.msra.mxu0 0
  %589 = vmatprep.subr.bf16.mxu0 0
  %590 = vmatpush2.bf16.msra.mxu0 0
  %591 = vmatprep.subr.bf16.mxu0 0
  %592 = vmatpush2.bf16.msra.mxu0 0
  %593 = vmatprep.subr.bf16.mxu0 0
  %594 = vmatpush2.bf16.msra.mxu0 0
  %595 = vmatprep.mubr.bf16.mxu0 0
  %596 = vmatmul.mubr.bf16.gmra.mxu0 %v514
  %v597 = vpop.f32.mrf.mxu0
  %v598 = vadd.f32 0.0, %v597
  %v599 = vpop.f32.mrf.mxu0
  %v600 = vpop.f32.mrf.mxu0
  %v601 = vpop.f32.mrf.mxu0
  %602 = vdwg.mxu0
  %v603 = vadd.f32 %v431, %v598
  %v604 = vlaneseq
  %v605 = vshrl.u32 %v604, 7
  %v606 = vsub.s32 0, %v605
  %v607 = vrot.slane %v341, %v606
  %v608 = vadd.f32 %v603, %v607
  %v609 = vsel %vm254, %v608, 0.0
  %610 = vadd.xlane.f32.xlu0 %v609
  %v611 = vpop.xlane.xlu0 %610
  %v612 = vmul.f32 %v611, %v411
  %v613 = vsub.f32 %v608, %v612
  %v614 = vmul.f32 %v613, %v613
  %v615 = vsel %vm254, %v614, 0.0
  %616 = vadd.xlane.f32.xlu0 %v615
  %v617 = vpop.xlane.xlu0 %616
  %v618 = vmul.f32 %v617, %v411
  %v619 = vadd.f32 %v618, 1e-05
  %v620 = vrsqrt.pop %v619
  %v621 = vmul.f32 %v613, %v620
  %v622 = vlaneseq
  %v623 = vshrl.u32 %v622, 7
  %v624 = vsub.s32 0, %v623
  %v625 = vrot.slane %v342, %v624
  %v626 = vmul.f32 %v621, %v625
  %v627 = vlaneseq
  %v628 = vshrl.u32 %v627, 7
  %v629 = vsub.s32 0, %v628
  %v630 = vrot.slane %v343, %v629
  %v631 = vadd.f32 %v626, %v630
  %v632 = vld [vmem:[%s6 + $0x7] sm:$0x1]
  %v633 = vld [vmem:[%s6 + $0x8] sm:$0x1]
  %v634 = vld [vmem:[%s6 + $0x9] sm:$0x1]
  %v635 = vld [vmem:[%s6 + $0xa] sm:$0x1]
  %v636 = vld [vmem:[%s6 + $0xb] sm:$0x1]
  %v637 = vld [vmem:[%s6 + $0xc] sm:$0x1]
  %s638 = scalar_lea.vmem %s2, 16
  %v639 = vld [vmem:[%s638] sm:$0xf]
  %v640 = vld [vmem:[%s638 + $0x4] sm:$0xf]
  %v641 = vld [vmem:[%s638 + $0x8] sm:$0xf]
  %v642 = vld [vmem:[%s638 + $0xc] sm:$0xf]
  %v643 = vpack.c.bf16 %v631, %v631
  %v644 = vlaneseq
  %v645 = vshrl.u32 %v644, 7
  %v646 = vsub.s32 0, %v645
  %v647 = vrot.slane %v632, %v646
  %v652 = vunpack.c.l.b16 %v639
  %v653 = vunpack.c.l.b16 %v640
  %v654 = vunpack.c.l.b16 %v641
  %v655 = vunpack.c.l.b16 %v642
  %v656 = vpack.c.b16 %v653, %v652
  %v657 = vpack.c.b16 %v655, %v654
  %v661 = vsel %vm254, %v643, 0
  %663 = vmatprep.subr.bf16.mxu0 0
  %664 = vmatpush1.bf16.msra.mxu0 0
  %665 = vmatprep.subr.bf16.mxu0 0
  %666 = vmatpush1.bf16.msra.mxu0 0
  %667 = vmatprep.subr.bf16.mxu0 0
  %668 = vmatpush1.bf16.msra.mxu0 0
  %669 = vmatprep.subr.bf16.mxu0 0
  %670 = vmatpush1.bf16.msra.mxu0 0
  %671 = vmatprep.subr.bf16.mxu0 0
  %672 = vmatpush1.bf16.msra.mxu0 0
  %673 = vmatprep.subr.bf16.mxu0 0
  %674 = vmatpush1.bf16.msra.mxu0 0
  %675 = vmatprep.subr.bf16.mxu0 0
  %676 = vmatpush1.bf16.msra.mxu0 %v657
  %677 = vmatprep.subr.bf16.mxu0 0
  %678 = vmatpush1.bf16.msra.mxu0 %v656
  %679 = vmatprep.subr.bf16.mxu0 0
  %680 = vmatpush2.bf16.msra.mxu0 0
  %681 = vmatprep.subr.bf16.mxu0 0
  %682 = vmatpush2.bf16.msra.mxu0 0
  %683 = vmatprep.subr.bf16.mxu0 0
  %684 = vmatpush2.bf16.msra.mxu0 0
  %685 = vmatprep.subr.bf16.mxu0 0
  %686 = vmatpush2.bf16.msra.mxu0 0
  %687 = vmatprep.subr.bf16.mxu0 0
  %688 = vmatpush2.bf16.msra.mxu0 0
  %689 = vmatprep.subr.bf16.mxu0 0
  %690 = vmatpush2.bf16.msra.mxu0 0
  %691 = vmatprep.subr.bf16.mxu0 0
  %692 = vmatpush2.bf16.msra.mxu0 0
  %693 = vmatprep.subr.bf16.mxu0 0
  %694 = vmatpush2.bf16.msra.mxu0 0
  %695 = vmatprep.mubr.bf16.mxu0 0
  %696 = vmatmul.mubr.bf16.gmra.mxu0 %v661
  %v697 = vpop.f32.mrf.mxu0
  %v698 = vadd.f32 %v647, %v697
  %v699 = vpop.f32.mrf.mxu0
  %v700 = vpop.f32.mrf.mxu0
  %v701 = vpop.f32.mrf.mxu0
  %702 = vdwg.mxu0
  %v703 = vsel %vm254, %v698, 0.0
  %704 = vadd.xlane.f32.xlu0 %v703
  %v705 = vpop.xlane.xlu0 %704
  %v706 = vmul.f32 %v705, %v411
  %v707 = vsub.f32 %v698, %v706
  %v708 = vmul.f32 %v707, %v707
  %v709 = vsel %vm254, %v708, 0.0
  %710 = vadd.xlane.f32.xlu0 %v709
  %v711 = vpop.xlane.xlu0 %710
  %v712 = vmul.f32 %v711, %v411
  %v713 = vadd.f32 %v712, 1e-05
  %v714 = vrsqrt.pop %v713
  %v715 = vmul.f32 %v707, %v714
  %v716 = vlaneseq
  %v717 = vshrl.u32 %v716, 7
  %v718 = vsub.s32 0, %v717
  %v719 = vrot.slane %v633, %v718
  %v720 = vmul.f32 %v715, %v719
  %v721 = vlaneseq
  %v722 = vshrl.u32 %v721, 7
  %v723 = vsub.s32 0, %v722
  %v724 = vrot.slane %v634, %v723
  %v725 = vadd.f32 %v720, %v724
  %s726 = scalar_lea.vmem %s3, 16
  %v727 = vld [vmem:[%s726] sm:$0xf]
  %v728 = vld [vmem:[%s726 + $0x4] sm:$0xf]
  %v729 = vld [vmem:[%s726 + $0x8] sm:$0xf]
  %v730 = vld [vmem:[%s726 + $0xc] sm:$0xf]
  %v731 = vpack.c.bf16 %v725, %v725
  %v732 = vld [vmem:[%s7 + $0x1] sm:$0x1]
  %v733 = vlaneseq
  %v734 = vshrl.u32 %v733, 7
  %v735 = vsub.s32 0, %v734
  %v736 = vrot.slane %v732, %v735
  %v741 = vunpack.c.l.b16 %v727
  %v742 = vunpack.c.l.b16 %v728
  %v743 = vunpack.c.l.b16 %v729
  %v744 = vunpack.c.l.b16 %v730
  %v745 = vpack.c.b16 %v742, %v741
  %v746 = vpack.c.b16 %v744, %v743
  %v750 = vsel %vm254, %v731, 0
  %752 = vmatprep.subr.bf16.mxu0 0
  %753 = vmatpush1.bf16.msra.mxu0 0
  %754 = vmatprep.subr.bf16.mxu0 0
  %755 = vmatpush1.bf16.msra.mxu0 0
  %756 = vmatprep.subr.bf16.mxu0 0
  %757 = vmatpush1.bf16.msra.mxu0 0
  %758 = vmatprep.subr.bf16.mxu0 0
  %759 = vmatpush1.bf16.msra.mxu0 0
  %760 = vmatprep.subr.bf16.mxu0 0
  %761 = vmatpush1.bf16.msra.mxu0 0
  %762 = vmatprep.subr.bf16.mxu0 0
  %763 = vmatpush1.bf16.msra.mxu0 0
  %764 = vmatprep.subr.bf16.mxu0 0
  %765 = vmatpush1.bf16.msra.mxu0 %v746
  %766 = vmatprep.subr.bf16.mxu0 0
  %767 = vmatpush1.bf16.msra.mxu0 %v745
  %768 = vmatprep.subr.bf16.mxu0 0
  %769 = vmatpush2.bf16.msra.mxu0 0
  %770 = vmatprep.subr.bf16.mxu0 0
  %771 = vmatpush2.bf16.msra.mxu0 0
  %772 = vmatprep.subr.bf16.mxu0 0
  %773 = vmatpush2.bf16.msra.mxu0 0
  %774 = vmatprep.subr.bf16.mxu0 0
  %775 = vmatpush2.bf16.msra.mxu0 0
  %776 = vmatprep.subr.bf16.mxu0 0
  %777 = vmatpush2.bf16.msra.mxu0 0
  %778 = vmatprep.subr.bf16.mxu0 0
  %779 = vmatpush2.bf16.msra.mxu0 0
  %780 = vmatprep.subr.bf16.mxu0 0
  %781 = vmatpush2.bf16.msra.mxu0 0
  %782 = vmatprep.subr.bf16.mxu0 0
  %783 = vmatpush2.bf16.msra.mxu0 0
  %784 = vmatprep.mubr.bf16.mxu0 0
  %785 = vmatmul.mubr.bf16.gmra.mxu0 %v750
  %v786 = vpop.f32.mrf.mxu0
  %v787 = vadd.f32 %v736, %v786
  %v788 = vpop.f32.mrf.mxu0
  %v789 = vpop.f32.mrf.mxu0
  %v790 = vpop.f32.mrf.mxu0
  %791 = vdwg.mxu0
  %v792 = vmax.f32 %v787, 0.0
  %s793 = scalar_lea.vmem %s4, 64
  %v794 = vld [vmem:[%s793] sm:$0xf]
  %v795 = vld [vmem:[%s793 + $0x4] sm:$0xf]
  %v796 = vld [vmem:[%s793 + $0x8] sm:$0xf]
  %v797 = vld [vmem:[%s793 + $0xc] sm:$0xf]
  %v798 = vld [vmem:[%s793 + $0x10] sm:$0xf]
  %v799 = vld [vmem:[%s793 + $0x14] sm:$0xf]
  %v800 = vld [vmem:[%s793 + $0x18] sm:$0xf]
  %v801 = vld [vmem:[%s793 + $0x1c] sm:$0xf]
  %v802 = vld [vmem:[%s793 + $0x20] sm:$0xf]
  %v803 = vld [vmem:[%s793 + $0x24] sm:$0xf]
  %v804 = vld [vmem:[%s793 + $0x28] sm:$0xf]
  %v805 = vld [vmem:[%s793 + $0x2c] sm:$0xf]
  %v806 = vld [vmem:[%s793 + $0x30] sm:$0xf]
  %v807 = vld [vmem:[%s793 + $0x34] sm:$0xf]
  %v808 = vld [vmem:[%s793 + $0x38] sm:$0xf]
  %v809 = vld [vmem:[%s793 + $0x3c] sm:$0xf]
  %v810 = vpack.c.bf16 %v792, %v792
  %v827 = vunpack.c.l.b16 %v794
  %v828 = vunpack.c.l.b16 %v795
  %v829 = vunpack.c.l.b16 %v796
  %v830 = vunpack.c.l.b16 %v797
  %v831 = vunpack.c.l.b16 %v798
  %v832 = vunpack.c.l.b16 %v799
  %v833 = vunpack.c.l.b16 %v800
  %v834 = vunpack.c.l.b16 %v801
  %v835 = vunpack.c.l.b16 %v802
  %v836 = vunpack.c.l.b16 %v803
  %v837 = vunpack.c.l.b16 %v804
  %v838 = vunpack.c.l.b16 %v805
  %v839 = vunpack.c.l.b16 %v806
  %v840 = vunpack.c.l.b16 %v807
  %v841 = vunpack.c.l.b16 %v808
  %v842 = vunpack.c.l.b16 %v809
  %v843 = vpack.c.b16 %v828, %v827
  %v844 = vpack.c.b16 %v830, %v829
  %v845 = vpack.c.b16 %v832, %v831
  %v846 = vpack.c.b16 %v834, %v833
  %v847 = vpack.c.b16 %v836, %v835
  %v848 = vpack.c.b16 %v838, %v837
  %v849 = vpack.c.b16 %v840, %v839
  %v850 = vpack.c.b16 %v842, %v841
  %859 = vmatprep.subr.bf16.mxu0 0
  %860 = vmatpush1.bf16.msra.mxu0 %v850
  %861 = vmatprep.subr.bf16.mxu0 0
  %862 = vmatpush1.bf16.msra.mxu0 %v849
  %863 = vmatprep.subr.bf16.mxu0 0
  %864 = vmatpush1.bf16.msra.mxu0 %v848
  %865 = vmatprep.subr.bf16.mxu0 0
  %866 = vmatpush1.bf16.msra.mxu0 %v847
  %867 = vmatprep.subr.bf16.mxu0 0
  %868 = vmatpush1.bf16.msra.mxu0 %v846
  %869 = vmatprep.subr.bf16.mxu0 0
  %870 = vmatpush1.bf16.msra.mxu0 %v845
  %871 = vmatprep.subr.bf16.mxu0 0
  %872 = vmatpush1.bf16.msra.mxu0 %v844
  %873 = vmatprep.subr.bf16.mxu0 0
  %874 = vmatpush1.bf16.msra.mxu0 %v843
  %875 = vmatprep.subr.bf16.mxu0 0
  %876 = vmatpush2.bf16.msra.mxu0 0
  %877 = vmatprep.subr.bf16.mxu0 0
  %878 = vmatpush2.bf16.msra.mxu0 0
  %879 = vmatprep.subr.bf16.mxu0 0
  %880 = vmatpush2.bf16.msra.mxu0 0
  %881 = vmatprep.subr.bf16.mxu0 0
  %882 = vmatpush2.bf16.msra.mxu0 0
  %883 = vmatprep.subr.bf16.mxu0 0
  %884 = vmatpush2.bf16.msra.mxu0 0
  %885 = vmatprep.subr.bf16.mxu0 0
  %886 = vmatpush2.bf16.msra.mxu0 0
  %887 = vmatprep.subr.bf16.mxu0 0
  %888 = vmatpush2.bf16.msra.mxu0 0
  %889 = vmatprep.subr.bf16.mxu0 0
  %890 = vmatpush2.bf16.msra.mxu0 0
  %891 = vmatprep.mubr.bf16.mxu0 0
  %892 = vmatmul.mubr.bf16.gmra.mxu0 %v810
  %v893 = vpop.f32.mrf.mxu0
  %v894 = vadd.f32 0.0, %v893
  %v895 = vpop.f32.mrf.mxu0
  %v896 = vpop.f32.mrf.mxu0
  %v897 = vpop.f32.mrf.mxu0
  %898 = vdwg.mxu0
  %v899 = vadd.f32 %v725, %v894
  %v900 = vlaneseq
  %v901 = vshrl.u32 %v900, 7
  %v902 = vsub.s32 0, %v901
  %v903 = vrot.slane %v635, %v902
  %v904 = vadd.f32 %v899, %v903
  %v905 = vsel %vm254, %v904, 0.0
  %906 = vadd.xlane.f32.xlu0 %v905
  %v907 = vpop.xlane.xlu0 %906
  %v908 = vmul.f32 %v907, %v411
  %v909 = vsub.f32 %v904, %v908
  %v910 = vmul.f32 %v909, %v909
  %v911 = vsel %vm254, %v910, 0.0
  %912 = vadd.xlane.f32.xlu0 %v911
  %v913 = vpop.xlane.xlu0 %912
  %v914 = vmul.f32 %v913, %v411
  %v915 = vadd.f32 %v914, 1e-05
  %v916 = vrsqrt.pop %v915
  %v917 = vmul.f32 %v909, %v916
  %v918 = vlaneseq
  %v919 = vshrl.u32 %v918, 7
  %v920 = vsub.s32 0, %v919
  %v921 = vrot.slane %v636, %v920
  %v922 = vmul.f32 %v917, %v921
  %v923 = vlaneseq
  %v924 = vshrl.u32 %v923, 7
  %v925 = vsub.s32 0, %v924
  %v926 = vrot.slane %v637, %v925
  %v927 = vadd.f32 %v922, %v926
  %v928 = vld [vmem:[%s6 + $0xd] sm:$0x1]
  %v929 = vld [vmem:[%s6 + $0xe] sm:$0x1]
  %v930 = vld [vmem:[%s6 + $0xf] sm:$0x1]
  %v931 = vld [vmem:[%s6 + $0x10] sm:$0x1]
  %v932 = vld [vmem:[%s6 + $0x11] sm:$0x1]
  %v933 = vld [vmem:[%s6 + $0x12] sm:$0x1]
  %s934 = scalar_lea.vmem %s2, 32
  %v935 = vld [vmem:[%s934] sm:$0xf]
  %v936 = vld [vmem:[%s934 + $0x4] sm:$0xf]
  %v937 = vld [vmem:[%s934 + $0x8] sm:$0xf]
  %v938 = vld [vmem:[%s934 + $0xc] sm:$0xf]
  %v939 = vpack.c.bf16 %v927, %v927
  %v940 = vlaneseq
  %v941 = vshrl.u32 %v940, 7
  %v942 = vsub.s32 0, %v941
  %v943 = vrot.slane %v928, %v942
  %v948 = vunpack.c.l.b16 %v935
  %v949 = vunpack.c.l.b16 %v936
  %v950 = vunpack.c.l.b16 %v937
  %v951 = vunpack.c.l.b16 %v938
  %v952 = vpack.c.b16 %v949, %v948
  %v953 = vpack.c.b16 %v951, %v950
  %v957 = vsel %vm254, %v939, 0
  %959 = vmatprep.subr.bf16.mxu0 0
  %960 = vmatpush1.bf16.msra.mxu0 0
  %961 = vmatprep.subr.bf16.mxu0 0
  %962 = vmatpush1.bf16.msra.mxu0 0
  %963 = vmatprep.subr.bf16.mxu0 0
  %964 = vmatpush1.bf16.msra.mxu0 0
  %965 = vmatprep.subr.bf16.mxu0 0
  %966 = vmatpush1.bf16.msra.mxu0 0
  %967 = vmatprep.subr.bf16.mxu0 0
  %968 = vmatpush1.bf16.msra.mxu0 0
  %969 = vmatprep.subr.bf16.mxu0 0
  %970 = vmatpush1.bf16.msra.mxu0 0
  %971 = vmatprep.subr.bf16.mxu0 0
  %972 = vmatpush1.bf16.msra.mxu0 %v953
  %973 = vmatprep.subr.bf16.mxu0 0
  %974 = vmatpush1.bf16.msra.mxu0 %v952
  %975 = vmatprep.subr.bf16.mxu0 0
  %976 = vmatpush2.bf16.msra.mxu0 0
  %977 = vmatprep.subr.bf16.mxu0 0
  %978 = vmatpush2.bf16.msra.mxu0 0
  %979 = vmatprep.subr.bf16.mxu0 0
  %980 = vmatpush2.bf16.msra.mxu0 0
  %981 = vmatprep.subr.bf16.mxu0 0
  %982 = vmatpush2.bf16.msra.mxu0 0
  %983 = vmatprep.subr.bf16.mxu0 0
  %984 = vmatpush2.bf16.msra.mxu0 0
  %985 = vmatprep.subr.bf16.mxu0 0
  %986 = vmatpush2.bf16.msra.mxu0 0
  %987 = vmatprep.subr.bf16.mxu0 0
  %988 = vmatpush2.bf16.msra.mxu0 0
  %989 = vmatprep.subr.bf16.mxu0 0
  %990 = vmatpush2.bf16.msra.mxu0 0
  %991 = vmatprep.mubr.bf16.mxu0 0
  %992 = vmatmul.mubr.bf16.gmra.mxu0 %v957
  %v993 = vpop.f32.mrf.mxu0
  %v994 = vadd.f32 %v943, %v993
  %v995 = vpop.f32.mrf.mxu0
  %v996 = vpop.f32.mrf.mxu0
  %v997 = vpop.f32.mrf.mxu0
  %998 = vdwg.mxu0
  %v999 = vsel %vm254, %v994, 0.0
  %1000 = vadd.xlane.f32.xlu0 %v999
  %v1001 = vpop.xlane.xlu0 %1000
  %v1002 = vmul.f32 %v1001, %v411
  %v1003 = vsub.f32 %v994, %v1002
  %v1004 = vmul.f32 %v1003, %v1003
  %v1005 = vsel %vm254, %v1004, 0.0
  %1006 = vadd.xlane.f32.xlu0 %v1005
  %v1007 = vpop.xlane.xlu0 %1006
  %v1008 = vmul.f32 %v1007, %v411
  %v1009 = vadd.f32 %v1008, 1e-05
  %v1010 = vrsqrt.pop %v1009
  %v1011 = vmul.f32 %v1003, %v1010
  %v1012 = vlaneseq
  %v1013 = vshrl.u32 %v1012, 7
  %v1014 = vsub.s32 0, %v1013
  %v1015 = vrot.slane %v929, %v1014
  %v1016 = vmul.f32 %v1011, %v1015
  %v1017 = vlaneseq
  %v1018 = vshrl.u32 %v1017, 7
  %v1019 = vsub.s32 0, %v1018
  %v1020 = vrot.slane %v930, %v1019
  %v1021 = vadd.f32 %v1016, %v1020
  %s1022 = scalar_lea.vmem %s3, 32
  %v1023 = vld [vmem:[%s1022] sm:$0xf]
  %v1024 = vld [vmem:[%s1022 + $0x4] sm:$0xf]
  %v1025 = vld [vmem:[%s1022 + $0x8] sm:$0xf]
  %v1026 = vld [vmem:[%s1022 + $0xc] sm:$0xf]
  %v1027 = vpack.c.bf16 %v1021, %v1021
  %v1028 = vld [vmem:[%s7 + $0x2] sm:$0x1]
  %v1029 = vlaneseq
  %v1030 = vshrl.u32 %v1029, 7
  %v1031 = vsub.s32 0, %v1030
  %v1032 = vrot.slane %v1028, %v1031
  %v1037 = vunpack.c.l.b16 %v1023
  %v1038 = vunpack.c.l.b16 %v1024
  %v1039 = vunpack.c.l.b16 %v1025
  %v1040 = vunpack.c.l.b16 %v1026
  %v1041 = vpack.c.b16 %v1038, %v1037
  %v1042 = vpack.c.b16 %v1040, %v1039
  %v1046 = vsel %vm254, %v1027, 0
  %1048 = vmatprep.subr.bf16.mxu0 0
  %1049 = vmatpush1.bf16.msra.mxu0 0
  %1050 = vmatprep.subr.bf16.mxu0 0
  %1051 = vmatpush1.bf16.msra.mxu0 0
  %1052 = vmatprep.subr.bf16.mxu0 0
  %1053 = vmatpush1.bf16.msra.mxu0 0
  %1054 = vmatprep.subr.bf16.mxu0 0
  %1055 = vmatpush1.bf16.msra.mxu0 0
  %1056 = vmatprep.subr.bf16.mxu0 0
  %1057 = vmatpush1.bf16.msra.mxu0 0
  %1058 = vmatprep.subr.bf16.mxu0 0
  %1059 = vmatpush1.bf16.msra.mxu0 0
  %1060 = vmatprep.subr.bf16.mxu0 0
  %1061 = vmatpush1.bf16.msra.mxu0 %v1042
  %1062 = vmatprep.subr.bf16.mxu0 0
  %1063 = vmatpush1.bf16.msra.mxu0 %v1041
  %1064 = vmatprep.subr.bf16.mxu0 0
  %1065 = vmatpush2.bf16.msra.mxu0 0
  %1066 = vmatprep.subr.bf16.mxu0 0
  %1067 = vmatpush2.bf16.msra.mxu0 0
  %1068 = vmatprep.subr.bf16.mxu0 0
  %1069 = vmatpush2.bf16.msra.mxu0 0
  %1070 = vmatprep.subr.bf16.mxu0 0
  %1071 = vmatpush2.bf16.msra.mxu0 0
  %1072 = vmatprep.subr.bf16.mxu0 0
  %1073 = vmatpush2.bf16.msra.mxu0 0
  %1074 = vmatprep.subr.bf16.mxu0 0
  %1075 = vmatpush2.bf16.msra.mxu0 0
  %1076 = vmatprep.subr.bf16.mxu0 0
  %1077 = vmatpush2.bf16.msra.mxu0 0
  %1078 = vmatprep.subr.bf16.mxu0 0
  %1079 = vmatpush2.bf16.msra.mxu0 0
  %1080 = vmatprep.mubr.bf16.mxu0 0
  %1081 = vmatmul.mubr.bf16.gmra.mxu0 %v1046
  %v1082 = vpop.f32.mrf.mxu0
  %v1083 = vadd.f32 %v1032, %v1082
  %v1084 = vpop.f32.mrf.mxu0
  %v1085 = vpop.f32.mrf.mxu0
  %v1086 = vpop.f32.mrf.mxu0
  %1087 = vdwg.mxu0
  %v1088 = vmax.f32 %v1083, 0.0
  %s1089 = scalar_lea.vmem %s4, 128
  %v1090 = vld [vmem:[%s1089] sm:$0xf]
  %v1091 = vld [vmem:[%s1089 + $0x4] sm:$0xf]
  %v1092 = vld [vmem:[%s1089 + $0x8] sm:$0xf]
  %v1093 = vld [vmem:[%s1089 + $0xc] sm:$0xf]
  %v1094 = vld [vmem:[%s1089 + $0x10] sm:$0xf]
  %v1095 = vld [vmem:[%s1089 + $0x14] sm:$0xf]
  %v1096 = vld [vmem:[%s1089 + $0x18] sm:$0xf]
  %v1097 = vld [vmem:[%s1089 + $0x1c] sm:$0xf]
  %v1098 = vld [vmem:[%s1089 + $0x20] sm:$0xf]
  %v1099 = vld [vmem:[%s1089 + $0x24] sm:$0xf]
  %v1100 = vld [vmem:[%s1089 + $0x28] sm:$0xf]
  %v1101 = vld [vmem:[%s1089 + $0x2c] sm:$0xf]
  %v1102 = vld [vmem:[%s1089 + $0x30] sm:$0xf]
  %v1103 = vld [vmem:[%s1089 + $0x34] sm:$0xf]
  %v1104 = vld [vmem:[%s1089 + $0x38] sm:$0xf]
  %v1105 = vld [vmem:[%s1089 + $0x3c] sm:$0xf]
  %v1106 = vpack.c.bf16 %v1088, %v1088
  %v1123 = vunpack.c.l.b16 %v1090
  %v1124 = vunpack.c.l.b16 %v1091
  %v1125 = vunpack.c.l.b16 %v1092
  %v1126 = vunpack.c.l.b16 %v1093
  %v1127 = vunpack.c.l.b16 %v1094
  %v1128 = vunpack.c.l.b16 %v1095
  %v1129 = vunpack.c.l.b16 %v1096
  %v1130 = vunpack.c.l.b16 %v1097
  %v1131 = vunpack.c.l.b16 %v1098
  %v1132 = vunpack.c.l.b16 %v1099
  %v1133 = vunpack.c.l.b16 %v1100
  %v1134 = vunpack.c.l.b16 %v1101
  %v1135 = vunpack.c.l.b16 %v1102
  %v1136 = vunpack.c.l.b16 %v1103
  %v1137 = vunpack.c.l.b16 %v1104
  %v1138 = vunpack.c.l.b16 %v1105
  %v1139 = vpack.c.b16 %v1124, %v1123
  %v1140 = vpack.c.b16 %v1126, %v1125
  %v1141 = vpack.c.b16 %v1128, %v1127
  %v1142 = vpack.c.b16 %v1130, %v1129
  %v1143 = vpack.c.b16 %v1132, %v1131
  %v1144 = vpack.c.b16 %v1134, %v1133
  %v1145 = vpack.c.b16 %v1136, %v1135
  %v1146 = vpack.c.b16 %v1138, %v1137
  %1155 = vmatprep.subr.bf16.mxu0 0
  %1156 = vmatpush1.bf16.msra.mxu0 %v1146
  %1157 = vmatprep.subr.bf16.mxu0 0
  %1158 = vmatpush1.bf16.msra.mxu0 %v1145
  %1159 = vmatprep.subr.bf16.mxu0 0
  %1160 = vmatpush1.bf16.msra.mxu0 %v1144
  %1161 = vmatprep.subr.bf16.mxu0 0
  %1162 = vmatpush1.bf16.msra.mxu0 %v1143
  %1163 = vmatprep.subr.bf16.mxu0 0
  %1164 = vmatpush1.bf16.msra.mxu0 %v1142
  %1165 = vmatprep.subr.bf16.mxu0 0
  %1166 = vmatpush1.bf16.msra.mxu0 %v1141
  %1167 = vmatprep.subr.bf16.mxu0 0
  %1168 = vmatpush1.bf16.msra.mxu0 %v1140
  %1169 = vmatprep.subr.bf16.mxu0 0
  %1170 = vmatpush1.bf16.msra.mxu0 %v1139
  %1171 = vmatprep.subr.bf16.mxu0 0
  %1172 = vmatpush2.bf16.msra.mxu0 0
  %1173 = vmatprep.subr.bf16.mxu0 0
  %1174 = vmatpush2.bf16.msra.mxu0 0
  %1175 = vmatprep.subr.bf16.mxu0 0
  %1176 = vmatpush2.bf16.msra.mxu0 0
  %1177 = vmatprep.subr.bf16.mxu0 0
  %1178 = vmatpush2.bf16.msra.mxu0 0
  %1179 = vmatprep.subr.bf16.mxu0 0
  %1180 = vmatpush2.bf16.msra.mxu0 0
  %1181 = vmatprep.subr.bf16.mxu0 0
  %1182 = vmatpush2.bf16.msra.mxu0 0
  %1183 = vmatprep.subr.bf16.mxu0 0
  %1184 = vmatpush2.bf16.msra.mxu0 0
  %1185 = vmatprep.subr.bf16.mxu0 0
  %1186 = vmatpush2.bf16.msra.mxu0 0
  %1187 = vmatprep.mubr.bf16.mxu0 0
  %1188 = vmatmul.mubr.bf16.gmra.mxu0 %v1106
  %v1189 = vpop.f32.mrf.mxu0
  %v1190 = vadd.f32 0.0, %v1189
  %v1191 = vpop.f32.mrf.mxu0
  %v1192 = vpop.f32.mrf.mxu0
  %v1193 = vpop.f32.mrf.mxu0
  %1194 = vdwg.mxu0
  %v1195 = vadd.f32 %v1021, %v1190
  %v1196 = vlaneseq
  %v1197 = vshrl.u32 %v1196, 7
  %v1198 = vsub.s32 0, %v1197
  %v1199 = vrot.slane %v931, %v1198
  %v1200 = vadd.f32 %v1195, %v1199
  %v1201 = vsel %vm254, %v1200, 0.0
  %1202 = vadd.xlane.f32.xlu0 %v1201
  %v1203 = vpop.xlane.xlu0 %1202
  %v1204 = vmul.f32 %v1203, %v411
  %v1205 = vsub.f32 %v1200, %v1204
  %v1206 = vmul.f32 %v1205, %v1205
  %v1207 = vsel %vm254, %v1206, 0.0
  %1208 = vadd.xlane.f32.xlu0 %v1207
  %v1209 = vpop.xlane.xlu0 %1208
  %v1210 = vmul.f32 %v1209, %v411
  %v1211 = vadd.f32 %v1210, 1e-05
  %v1212 = vrsqrt.pop %v1211
  %v1213 = vmul.f32 %v1205, %v1212
  %v1214 = vlaneseq
  %v1215 = vshrl.u32 %v1214, 7
  %v1216 = vsub.s32 0, %v1215
  %v1217 = vrot.slane %v932, %v1216
  %v1218 = vmul.f32 %v1213, %v1217
  %v1219 = vlaneseq
  %v1220 = vshrl.u32 %v1219, 7
  %v1221 = vsub.s32 0, %v1220
  %v1222 = vrot.slane %v933, %v1221
  %v1223 = vadd.f32 %v1218, %v1222
  %v1224 = vsel %vm254, %v1223, 0.0
  %1225 = vadd.xlane.f32.xlu0 %v1224
  %v1226 = vpop.xlane.xlu0 %1225
  %v1227 = vmul.f32 %v1226, %v411
  %v1228 = vsub.f32 %v1223, %v1227
  %v1229 = vmul.f32 %v1228, %v1228
  %v1230 = vsel %vm254, %v1229, 0.0
  %1231 = vadd.xlane.f32.xlu0 %v1230
  %v1232 = vpop.xlane.xlu0 %1231
  %v1233 = vmul.f32 %v1232, %v411
  %v1234 = vadd.f32 %v1233, 1e-05
  %v1235 = vrsqrt.pop %v1234
  %v1236 = vmul.f32 %v1228, %v1235
  %v1237 = vld [vmem:[%s5] sm:$0xf]
  %v1238 = vld [vmem:[%s5 + $0x4] sm:$0xf]
  %v1239 = vld [vmem:[%s5 + $0x8] sm:$0xf]
  %v1240 = vld [vmem:[%s5 + $0xc] sm:$0xf]
  %v1241 = vpack.c.bf16 %v1236, %v1236
  %v1242 = vld [vmem:[%s8] sm:$0x1]
  %v1244 = vlaneseq
  %v1245 = vshrl.u32 %v1244, 7
  %v1246 = vsub.s32 0, %v1245
  %v1247 = vrot.slane %v1242, %v1246
  %v1253 = vunpack.c.l.b16 %v1237
  %v1254 = vunpack.c.l.b16 %v1238
  %v1255 = vunpack.c.l.b16 %v1239
  %v1256 = vunpack.c.l.b16 %v1240
  %v1257 = vpack.c.b16 %v1254, %v1253
  %v1258 = vpack.c.b16 %v1256, %v1255
  %v1262 = vsel %vm254, %v1241, 0
  %1264 = vmatprep.subr.bf16.mxu0 0
  %1265 = vmatpush1.bf16.msra.mxu0 0
  %1266 = vmatprep.subr.bf16.mxu0 0
  %1267 = vmatpush1.bf16.msra.mxu0 0
  %1268 = vmatprep.subr.bf16.mxu0 0
  %1269 = vmatpush1.bf16.msra.mxu0 0
  %1270 = vmatprep.subr.bf16.mxu0 0
  %1271 = vmatpush1.bf16.msra.mxu0 0
  %1272 = vmatprep.subr.bf16.mxu0 0
  %1273 = vmatpush1.bf16.msra.mxu0 0
  %1274 = vmatprep.subr.bf16.mxu0 0
  %1275 = vmatpush1.bf16.msra.mxu0 0
  %1276 = vmatprep.subr.bf16.mxu0 0
  %1277 = vmatpush1.bf16.msra.mxu0 %v1258
  %1278 = vmatprep.subr.bf16.mxu0 0
  %1279 = vmatpush1.bf16.msra.mxu0 %v1257
  %1280 = vmatprep.subr.bf16.mxu0 0
  %1281 = vmatpush2.bf16.msra.mxu0 0
  %1282 = vmatprep.subr.bf16.mxu0 0
  %1283 = vmatpush2.bf16.msra.mxu0 0
  %1284 = vmatprep.subr.bf16.mxu0 0
  %1285 = vmatpush2.bf16.msra.mxu0 0
  %1286 = vmatprep.subr.bf16.mxu0 0
  %1287 = vmatpush2.bf16.msra.mxu0 0
  %1288 = vmatprep.subr.bf16.mxu0 0
  %1289 = vmatpush2.bf16.msra.mxu0 0
  %1290 = vmatprep.subr.bf16.mxu0 0
  %1291 = vmatpush2.bf16.msra.mxu0 0
  %1292 = vmatprep.subr.bf16.mxu0 0
  %1293 = vmatpush2.bf16.msra.mxu0 0
  %1294 = vmatprep.subr.bf16.mxu0 0
  %1295 = vmatpush2.bf16.msra.mxu0 0
  %1296 = vmatprep.mubr.bf16.mxu0 0
  %1297 = vmatmul.mubr.bf16.gmra.mxu0 %v1262
  %v1298 = vpop.f32.mrf.mxu0
  %v1299 = vadd.f32 %v1247, %v1298
  %v1300 = vpop.f32.mrf.mxu0
  %v1301 = vpop.f32.mrf.mxu0
  %v1302 = vpop.f32.mrf.mxu0
  %1303 = vdwg.mxu0
  %1304 = vst [vmem:[%s9] sm:$0xff] %v1299
  // Predicated region
  $region38: #{music_mood_forward.1} parent=0 // pred_check
    _
  $region39: #{music_mood_forward.1} parent=0 // pred_check_branch
    %1306 = sbr.rel (0) target = $region41
  $region40: #{music_mood_forward.1} parent=0 // pred_region
    _
  $region41: #{music_mood_forward.1} parent=0 // pred_fallthru
    _
  // Predicated region
  $region42: #{music_mood_forward.1} parent=0 // pred_check
    _
  $region43: #{music_mood_forward.1} parent=0 // pred_check_branch
    %1308 = sbr.rel (0) target = $region45
  $region44: #{music_mood_forward.1} parent=0 // pred_region
    _
  $region45: #{music_mood_forward.1} parent=0 // pred_fallthru
    _

</llo_original>
